<compile_context>
chip_gen: v7x
topology: tpu7x:2x2x1
jax: 0.10.0
libtpu: 0.0.40
codegen_flags: <defaults>
</compile_context>

<pallas_src>
import functools

import jax
import jax.numpy as jnp
from jax import lax
from jax.experimental import pallas as pl
from jax.experimental.pallas import tpu as pltpu


# ----------------------------------------------------------------------------
# Pallas kernel: MiniPointNet (eval mode, BN + biases folded) over TN groups
# ----------------------------------------------------------------------------
def _minipointnet_kernel(x_ref, w1_ref, h1_ref, w2_ref, w23_ref,
                         w3g_ref, h3_ref, w4_ref, b4_ref,
                         o_ref, *, groups_per_tile, group_size):
    TN, S = groups_per_tile, group_size
    R = TN * S
    bf = jnp.bfloat16

    x = x_ref[...].astype(bf)                                             # (R, 3)

    # first_conv: Conv1d(3,128,bias=False)+BN(folded into w1/h1) -> ReLU
    f = jnp.dot(x, w1_ref[...], preferred_element_type=jnp.float32)
    f = jnp.maximum(f + h1_ref[...], 0.0).astype(bf)                      # (R, 128)

    # pooling path: f @ w2 (b2 folded into h3t downstream); per-group max
    p = jnp.dot(f, w2_ref[...], preferred_element_type=jnp.float32)       # (R, 256)
    g = jnp.max(p.reshape(TN, S, -1), axis=1)                             # (TN, 256)

    # second_conv, algebraically fused (no broadcast+concat, no per-point b2):
    #   cat([g_full, f2]) @ w3 == f @ (w2@w3_local) + bcast_S(g @ w3_global) + h3t
    h_loc = jnp.dot(f, w23_ref[...], preferred_element_type=jnp.float32)  # (R, 512)
    h_glb = jnp.dot(g.astype(bf), w3g_ref[...],
                    preferred_element_type=jnp.float32) + h3_ref[...]     # (TN, 512)
    h = jnp.maximum(h_loc.reshape(TN, S, -1) + h_glb[:, None, :], 0.0)    # (TN,S,512)
    h = jnp.dot(h.reshape(R, -1).astype(bf), w4_ref[...],
                preferred_element_type=jnp.float32) + b4_ref[...]         # (R, Tpad)

    # final per-group max pooling -> tokens (lane-dense Tpad-wide store)
    o_ref[...] = jnp.max(h.reshape(TN, S, -1), axis=1)


def _choose_tile_groups(num_groups, group_size, requested=None, max_rows=2048):
    """Largest divisor of num_groups that is a multiple of 8, keeps TN*S under
    max_rows (VMEM headroom, v7x-safe), and leaves >=2 grid steps when possible."""
    cap = max(1, max_rows // max(group_size, 1))
    if requested is not None:
        cap = min(cap, requested)
    if num_groups >= 2:
        cap = min(cap, num_groups // 2)
    cap = min(cap, num_groups)
    for t in range(cap, 0, -1):
        if num_groups % t == 0 and t % 8 == 0:
            return t
    return num_groups  # fallback: single grid step, full-extent blocks


def mini_pointnet_pallas(groups, fp, *, token_dim, tile_groups=None):
    """groups: (N, S, 3) f32 centered neighborhoods, N = B*G. Returns (N, token_dim)."""
    N, S, C = groups.shape
    Tpad = fp["w4"].shape[-1]
    tg = _choose_tile_groups(N, S, tile_groups)
    rows = tg * S

    # reshape in the wrapper (free HBM metadata); kernel sees a (rows, 3) block
    x = groups.reshape(N * S, C)

    def const_spec(arr):
        nd = arr.ndim
        return pl.BlockSpec(arr.shape, lambda i, _nd=nd: (0,) * _nd)

    weights = (fp["w1"], fp["h1"], fp["w2"], fp["w23"],
               fp["w3g"], fp["h3t"], fp["w4"], fp["b4"])

    kernel = functools.partial(_minipointnet_kernel,
                               groups_per_tile=tg, group_size=S)

    out = pl.pallas_call(
        kernel,
        out_shape=jax.ShapeDtypeStruct((N, Tpad), jnp.float32),
        grid=(N // tg,),
        in_specs=[pl.BlockSpec((rows, C), lambda i: (i, 0))]
                 + [const_spec(w) for w in weights],
        out_specs=pl.BlockSpec((tg, Tpad), lambda i: (i, 0)),
        compiler_params=pltpu.CompilerParams(dimension_semantics=("parallel",)),
    )(x, *weights)
    return out[:, :token_dim]


# ----------------------------------------------------------------------------
# Plain-JAX reference (same folded bf16 params, original concat formulation)
# ----------------------------------------------------------------------------
def mini_pointnet_ref(groups, fp, token_dim):
    N, S, C = groups.shape
    bf = jnp.bfloat16
    x = groups.reshape(N * S, C).astype(bf)
    f = jnp.dot(x, fp["w1"], preferred_element_type=jnp.float32)
    f = jnp.maximum(f + fp["h1"], 0.0)
    f = jnp.dot(f.astype(bf), fp["w2"], preferred_element_type=jnp.float32) + fp["b2"]
    f3 = f.reshape(N, S, -1)
    g = jnp.max(f3, axis=1, keepdims=True)
    cat = jnp.concatenate([jnp.broadcast_to(g, f3.shape), f3], axis=-1)  # [global, local]
    w3_full = jnp.concatenate([fp["w3g"], fp["w3l"]], axis=0)
    h = jnp.dot(cat.reshape(N * S, -1).astype(bf), w3_full,
                preferred_element_type=jnp.float32) + fp["h3"]
    h = jnp.maximum(h, 0.0)
    h = jnp.dot(h.astype(bf), fp["w4"], preferred_element_type=jnp.float32) + fp["b4"]
    return jnp.max(h.reshape(N, S, -1), axis=1)[:, :token_dim]


# ----------------------------------------------------------------------------
# Grouping (FPS + KNN + gather) -- plain-JAX glue (data-dependent gathers)
# ----------------------------------------------------------------------------
def group_points(points, num_group, group_size):
    """points: (B, Np, 6). Returns centered xyz neighborhoods, normal
    neighborhoods and centers, matching Group.forward."""
    B, Np, _ = points.shape
    xyz = points[:, :, :3].astype(jnp.float32)
    nrm = points[:, :, 3:6].astype(jnp.float32)

    # TODO(synk): pytorch3d sample_farthest_points uses random_start_point=True;
    # here the start index is deterministically 0.
    def fps_single(pts):
        sel = jnp.zeros((num_group,), jnp.int32)
        dists = jnp.full((Np,), jnp.inf, jnp.float32)

        def body(i, carry):
            sel, dists = carry
            last = pts[sel[i - 1]]
            d = jnp.sum((pts - last) ** 2, axis=-1)
            dists = jnp.minimum(dists, d)
            sel = sel.at[i].set(jnp.argmax(dists).astype(jnp.int32))
            return sel, dists

        sel, _ = lax.fori_loop(1, num_group, body, (sel, dists))
        return pts[sel]

    centers = jax.vmap(fps_single)(xyz)                               # (B, G, 3)

    # knn_points(center, xyz, K=group_size): K nearest input points per center
    d2 = jnp.sum((centers[:, :, None, :] - xyz[:, None, :, :]) ** 2, axis=-1)
    _, idx = lax.top_k(-d2, group_size)                               # (B, G, S)

    gather = jax.vmap(lambda p, i: p[i])
    nbr_xyz = gather(xyz, idx) - centers[:, :, None, :]               # (B, G, S, 3)
    nbr_nrm = gather(nrm, idx)                                        # (B, G, S, 3)
    return nbr_xyz, nbr_nrm, centers


# ----------------------------------------------------------------------------
# Parameters: raw (PyTorch-like) init + eval-mode BN fold / w3 fold / bf16 cast
# ----------------------------------------------------------------------------
def init_raw_params(key, token_dim):
    ks = jax.random.split(key, 14)

    def nrm(k, shape, std):
        return (std * jax.random.normal(k, shape)).astype(jnp.float32)

    def uni(k, shape, lo, hi):
        return jax.random.uniform(k, shape, jnp.float32, lo, hi)

    return {
        # conv weights stored transposed as (Cin, Cout); PyTorch shape is (Cout, Cin, 1)
        "w1": nrm(ks[0], (3, 128), 3.0 ** -0.5),
        "w2": nrm(ks[1], (128, 256), 128.0 ** -0.5),
        "b2": nrm(ks[2], (256,), 0.02),
        "w3": nrm(ks[3], (512, 512), 512.0 ** -0.5),
        "w4": nrm(ks[4], (512, token_dim), 512.0 ** -0.5),
        "b4": nrm(ks[5], (token_dim,), 0.02),
        "bn1_gamma": uni(ks[6], (128,), 0.5, 1.5),
        "bn1_beta": nrm(ks[7], (128,), 0.1),
        "bn1_mean": nrm(ks[8], (128,), 0.1),
        "bn1_var": uni(ks[9], (128,), 0.5, 1.5),
        "bn3_gamma": uni(ks[10], (512,), 0.5, 1.5),
        "bn3_beta": nrm(ks[11], (512,), 0.1),
        "bn3_mean": nrm(ks[12], (512,), 0.1),
        "bn3_var": uni(ks[13], (512,), 0.5, 1.5),
    }


def fold_params(raw, token_dim, eps=1e-5):
    # TODO(synk): eval-mode BatchNorm fold only; training-mode batch statistics
    # are not supported by this kernel.
    s1 = raw["bn1_gamma"] / jnp.sqrt(raw["bn1_var"] + eps)
    h1 = raw["bn1_beta"] - raw["bn1_mean"] * s1
    s3 = raw["bn3_gamma"] / jnp.sqrt(raw["bn3_var"] + eps)
    h3 = raw["bn3_beta"] - raw["bn3_mean"] * s3

    w1f = raw["w1"] * s1[None, :]                        # (3, 128)
    w3f = raw["w3"] * s3[None, :]                        # (512, 512)
    w3g, w3l = w3f[:256], w3f[256:]                      # torch.cat order: [global, local]

    # Algebraic folds (in f32, then cast to bf16 once):
    #   f2 = f@w2 + b2 ; g_full = max_S(f2) = max_S(f@w2) + b2
    #   h_pre = f2@w3l + g_full@w3g + h3
    #         = f@(w2@w3l) + max_S(f@w2)@w3g + (h3 + b2@w3l + b2@w3g)
    w23 = raw["w2"] @ w3l                                # (128, 512)
    h3t = h3 + raw["b2"] @ w3l + raw["b2"] @ w3g         # (512,)

    token_pad = ((token_dim + 127) // 128) * 128
    w4, b4 = raw["w4"], raw["b4"]
    if token_pad != token_dim:
        w4 = jnp.pad(w4, ((0, 0), (0, token_pad - token_dim)))
        b4 = jnp.pad(b4, ((0, token_pad - token_dim),))

    bf = lambda a: a.astype(jnp.bfloat16)
    return {
        # kernel params
        "w1": bf(w1f), "h1": h1.reshape(1, -1),
        "w2": bf(raw["w2"]),
        "w23": bf(w23), "w3g": bf(w3g), "h3t": h3t.reshape(1, -1),
        "w4": bf(w4), "b4": b4.reshape(1, -1),
        # extra params used only by the plain-JAX (unfused) reference
        "b2": raw["b2"].reshape(1, -1), "w3l": bf(w3l), "h3": h3.reshape(1, -1),
    }


# ----------------------------------------------------------------------------
# Full PointcloudTokenizer forward
# ----------------------------------------------------------------------------
def pointcloud_tokenizer(points, folded_params, *, num_group, group_size,
                         token_dim, tile_groups=None):
    nbr_xyz, nbr_nrm, centers = group_points(points, num_group, group_size)
    B, G, S, C = nbr_xyz.shape
    tokens = mini_pointnet_pallas(
        nbr_xyz.reshape(B * G, S, C), folded_params,
        token_dim=token_dim, tile_groups=tile_groups,
    ).reshape(B, G, token_dim)
    return nbr_xyz, tokens, nbr_nrm, centers


if __name__ == "__main__":
    B, Np, G, S, T = 2, 64, 8, 16, 32          # batch, points, groups, group size, token dim
    key = jax.random.PRNGKey(0)
    kp, kx = jax.random.split(key)
    raw = init_raw_params(kp, T)
    fp = fold_params(raw, T)
    points = jax.random.normal(kx, (B, Np, 6), jnp.float32)

    fwd = jax.jit(functools.partial(pointcloud_tokenizer,
                                    num_group=G, group_size=S, token_dim=T))
    nbr, tokens, nbr_nrm, centers = jax.block_until_ready(fwd(points, fp))

    assert nbr.shape == (B, G, S, 3)
    assert tokens.shape == (B, G, T)
    assert nbr_nrm.shape == (B, G, S, 3)
    assert centers.shape == (B, G, 3)

    # correctness: Pallas kernel (fused w2@w3_local path) vs plain-JAX concat
    # formulation with the same folded bf16 weights.  Both paths round different
    # intermediates to bf16, so the tolerance reflects bf16 matmul error (~1%).
    ref = mini_pointnet_ref(nbr.reshape(B * G, S, 3), fp, T).reshape(B, G, T)
    max_err = float(jnp.max(jnp.abs(tokens - ref)))
    assert jnp.allclose(tokens, ref, atol=2e-2, rtol=2e-2), max_err

    print("KERNEL_OK")
</pallas_src>

<mosaic_0001>
module attributes {stable_mosaic.version = 11 : i64} {
  func.func @_minipointnet_kernel(%arg0: i32, %arg1: memref<128x3xf32, #tpu.memory_space<vmem>>, %arg2: memref<3x128xbf16, #tpu.memory_space<vmem>>, %arg3: memref<1x128xf32, #tpu.memory_space<vmem>>, %arg4: memref<128x256xbf16, #tpu.memory_space<vmem>>, %arg5: memref<128x512xbf16, #tpu.memory_space<vmem>>, %arg6: memref<256x512xbf16, #tpu.memory_space<vmem>>, %arg7: memref<1x512xf32, #tpu.memory_space<vmem>>, %arg8: memref<512x128xbf16, #tpu.memory_space<vmem>>, %arg9: memref<1x128xf32, #tpu.memory_space<vmem>>, %arg10: memref<8x128xf32, #tpu.memory_space<vmem>>) attributes {dimension_semantics = [#tpu.dimension_semantics<parallel>], iteration_bounds = array<i64: 2>, scalar_prefetch = 0 : i64, scratch_operands = 0 : i64, tpu.core_type = #tpu.core_type<tc>, window_params = [{transform_indices = @transform_0, window_bounds = array<i64: 128, 3>}, {pipeline_mode = #tpu.pipeline_mode<synchronous>, transform_indices = @transform_1, window_bounds = array<i64: 3, 128>}, {pipeline_mode = #tpu.pipeline_mode<synchronous>, transform_indices = @transform_2, window_bounds = array<i64: 1, 128>}, {pipeline_mode = #tpu.pipeline_mode<synchronous>, transform_indices = @transform_3, window_bounds = array<i64: 128, 256>}, {pipeline_mode = #tpu.pipeline_mode<synchronous>, transform_indices = @transform_4, window_bounds = array<i64: 128, 512>}, {pipeline_mode = #tpu.pipeline_mode<synchronous>, transform_indices = @transform_5, window_bounds = array<i64: 256, 512>}, {pipeline_mode = #tpu.pipeline_mode<synchronous>, transform_indices = @transform_6, window_bounds = array<i64: 1, 512>}, {pipeline_mode = #tpu.pipeline_mode<synchronous>, transform_indices = @transform_7, window_bounds = array<i64: 512, 128>}, {pipeline_mode = #tpu.pipeline_mode<synchronous>, transform_indices = @transform_8, window_bounds = array<i64: 1, 128>}, {transform_indices = @transform_9, window_bounds = array<i64: 8, 128>}]} {
    %c0 = arith.constant 0 : index
    %c0_0 = arith.constant 0 : index
    %0 = vector.load %arg1[%c0, %c0_0] : memref<128x3xf32, #tpu.memory_space<vmem>>, vector<128x3xf32>
    %1 = arith.truncf %0 : vector<128x3xf32> to vector<128x3xbf16>
    %c0_1 = arith.constant 0 : index
    %c0_2 = arith.constant 0 : index
    %2 = vector.load %arg2[%c0_1, %c0_2] : memref<3x128xbf16, #tpu.memory_space<vmem>>, vector<3x128xbf16>
    %cst = arith.constant dense<0.000000e+00> : vector<128x128xf32>
    %3 = tpu.matmul %1, %2, %cst {dimension_numbers = #tpu.dot_dimension_numbers<[1], [0], [0], [1], [0, 0, 1, 1], [], []>} : vector<128x3xbf16>, vector<3x128xbf16>, vector<128x128xf32> -> vector<128x128xf32>
    %c0_3 = arith.constant 0 : index
    %c0_4 = arith.constant 0 : index
    %4 = vector.load %arg3[%c0_3, %c0_4] : memref<1x128xf32, #tpu.memory_space<vmem>>, vector<1x128xf32>
    %5 = vector.broadcast %4 : vector<1x128xf32> to vector<128x128xf32>
    %6 = arith.addf %3, %5 : vector<128x128xf32>
    %cst_5 = arith.constant 0.000000e+00 : f32
    %7 = vector.broadcast %cst_5 : f32 to vector<128x128xf32>
    %8 = arith.maximumf %6, %7 : vector<128x128xf32>
    %9 = arith.truncf %8 : vector<128x128xf32> to vector<128x128xbf16>
    %c0_6 = arith.constant 0 : index
    %c0_7 = arith.constant 0 : index
    %10 = vector.load %arg4[%c0_6, %c0_7] : memref<128x256xbf16, #tpu.memory_space<vmem>>, vector<128x256xbf16>
    %cst_8 = arith.constant dense<0.000000e+00> : vector<128x256xf32>
    %11 = tpu.matmul %9, %10, %cst_8 {dimension_numbers = #tpu.dot_dimension_numbers<[1], [0], [0], [1], [0, 0, 1, 1], [], []>} : vector<128x128xbf16>, vector<128x256xbf16>, vector<128x256xf32> -> vector<128x256xf32>
    %12 = vector.shape_cast %11 : vector<128x256xf32> to vector<8x16x256xf32>
    %cst_9 = arith.constant dense<0xFF800000> : vector<8x256xf32>
    %13 = vector.multi_reduction <maximumf>, %12, %cst_9 [1] : vector<8x16x256xf32> to vector<8x256xf32>
    %c0_10 = arith.constant 0 : index
    %c0_11 = arith.constant 0 : index
    %14 = vector.load %arg5[%c0_10, %c0_11] : memref<128x512xbf16, #tpu.memory_space<vmem>>, vector<128x512xbf16>
    %cst_12 = arith.constant dense<0.000000e+00> : vector<128x512xf32>
    %15 = tpu.matmul %9, %14, %cst_12 {dimension_numbers = #tpu.dot_dimension_numbers<[1], [0], [0], [1], [0, 0, 1, 1], [], []>} : vector<128x128xbf16>, vector<128x512xbf16>, vector<128x512xf32> -> vector<128x512xf32>
    %16 = arith.truncf %13 : vector<8x256xf32> to vector<8x256xbf16>
    %c0_13 = arith.constant 0 : index
    %c0_14 = arith.constant 0 : index
    %17 = vector.load %arg6[%c0_13, %c0_14] : memref<256x512xbf16, #tpu.memory_space<vmem>>, vector<256x512xbf16>
    %cst_15 = arith.constant dense<0.000000e+00> : vector<8x512xf32>
    %18 = tpu.matmul %16, %17, %cst_15 {dimension_numbers = #tpu.dot_dimension_numbers<[1], [0], [0], [1], [0, 0, 1, 1], [], []>} : vector<8x256xbf16>, vector<256x512xbf16>, vector<8x512xf32> -> vector<8x512xf32>
    %c0_16 = arith.constant 0 : index
    %c0_17 = arith.constant 0 : index
    %19 = vector.load %arg7[%c0_16, %c0_17] : memref<1x512xf32, #tpu.memory_space<vmem>>, vector<1x512xf32>
    %20 = vector.broadcast %19 : vector<1x512xf32> to vector<8x512xf32>
    %21 = arith.addf %18, %20 : vector<8x512xf32>
    %22 = vector.shape_cast %15 : vector<128x512xf32> to vector<8x16x512xf32>
    %23 = vector.shape_cast %21 : vector<8x512xf32> to vector<8x1x512xf32>
    %24 = vector.broadcast %23 : vector<8x1x512xf32> to vector<8x16x512xf32>
    %25 = arith.addf %22, %24 : vector<8x16x512xf32>
    %cst_18 = arith.constant 0.000000e+00 : f32
    %26 = vector.broadcast %cst_18 : f32 to vector<8x16x512xf32>
    %27 = arith.maximumf %25, %26 : vector<8x16x512xf32>
    %28 = vector.shape_cast %27 : vector<8x16x512xf32> to vector<128x512xf32>
    %29 = arith.truncf %28 : vector<128x512xf32> to vector<128x512xbf16>
    %c0_19 = arith.constant 0 : index
    %c0_20 = arith.constant 0 : index
    %30 = vector.load %arg8[%c0_19, %c0_20] : memref<512x128xbf16, #tpu.memory_space<vmem>>, vector<512x128xbf16>
    %cst_21 = arith.constant dense<0.000000e+00> : vector<128x128xf32>
    %31 = tpu.matmul %29, %30, %cst_21 {dimension_numbers = #tpu.dot_dimension_numbers<[1], [0], [0], [1], [0, 0, 1, 1], [], []>} : vector<128x512xbf16>, vector<512x128xbf16>, vector<128x128xf32> -> vector<128x128xf32>
    %c0_22 = arith.constant 0 : index
    %c0_23 = arith.constant 0 : index
    %32 = vector.load %arg9[%c0_22, %c0_23] : memref<1x128xf32, #tpu.memory_space<vmem>>, vector<1x128xf32>
    %33 = vector.broadcast %32 : vector<1x128xf32> to vector<128x128xf32>
    %34 = arith.addf %31, %33 : vector<128x128xf32>
    %35 = vector.shape_cast %34 : vector<128x128xf32> to vector<8x16x128xf32>
    %cst_24 = arith.constant dense<0xFF800000> : vector<8x128xf32>
    %36 = vector.multi_reduction <maximumf>, %35, %cst_24 [1] : vector<8x16x128xf32> to vector<8x128xf32>
    %c0_25 = arith.constant 0 : index
    %c0_26 = arith.constant 0 : index
    %37 = vector.load %arg10[%c0_25, %c0_26] : memref<8x128xf32, #tpu.memory_space<vmem>>, vector<8x128xf32>
    tpu.vector_store %arg10[%c0_25, %c0_26], %36 {strides = array<i32>} : memref<8x128xf32, #tpu.memory_space<vmem>>, vector<8x128xf32>,
    return
  }
  func.func @transform_0(%arg0: i32) -> (i32, i32) {
    %c0_i32 = arith.constant 0 : i32
    %c0_i32_0 = arith.constant 0 : i32
    return %arg0, %c0_i32 : i32, i32
  }
  func.func @transform_1(%arg0: i32) -> (i32, i32) {
    %c0_i32 = arith.constant 0 : i32
    %c0_i32_0 = arith.constant 0 : i32
    %c0_i32_1 = arith.constant 0 : i32
    return %c0_i32, %c0_i32_0 : i32, i32
  }
  func.func @transform_2(%arg0: i32) -> (i32, i32) {
    %c0_i32 = arith.constant 0 : i32
    %c0_i32_0 = arith.constant 0 : i32
    %c0_i32_1 = arith.constant 0 : i32
    return %c0_i32, %c0_i32_0 : i32, i32
  }
  func.func @transform_3(%arg0: i32) -> (i32, i32) {
    %c0_i32 = arith.constant 0 : i32
    %c0_i32_0 = arith.constant 0 : i32
    %c0_i32_1 = arith.constant 0 : i32
    return %c0_i32, %c0_i32_0 : i32, i32
  }
  func.func @transform_4(%arg0: i32) -> (i32, i32) {
    %c0_i32 = arith.constant 0 : i32
    %c0_i32_0 = arith.constant 0 : i32
    %c0_i32_1 = arith.constant 0 : i32
    return %c0_i32, %c0_i32_0 : i32, i32
  }
  func.func @transform_5(%arg0: i32) -> (i32, i32) {
    %c0_i32 = arith.constant 0 : i32
    %c0_i32_0 = arith.constant 0 : i32
    %c0_i32_1 = arith.constant 0 : i32
    return %c0_i32, %c0_i32_0 : i32, i32
  }
  func.func @transform_6(%arg0: i32) -> (i32, i32) {
    %c0_i32 = arith.constant 0 : i32
    %c0_i32_0 = arith.constant 0 : i32
    %c0_i32_1 = arith.constant 0 : i32
    return %c0_i32, %c0_i32_0 : i32, i32
  }
  func.func @transform_7(%arg0: i32) -> (i32, i32) {
    %c0_i32 = arith.constant 0 : i32
    %c0_i32_0 = arith.constant 0 : i32
    %c0_i32_1 = arith.constant 0 : i32
    return %c0_i32, %c0_i32_0 : i32, i32
  }
  func.func @transform_8(%arg0: i32) -> (i32, i32) {
    %c0_i32 = arith.constant 0 : i32
    %c0_i32_0 = arith.constant 0 : i32
    %c0_i32_1 = arith.constant 0 : i32
    return %c0_i32, %c0_i32_0 : i32, i32
  }
  func.func @transform_9(%arg0: i32) -> (i32, i32) {
    %c0_i32 = arith.constant 0 : i32
    %c0_i32_0 = arith.constant 0 : i32
    return %arg0, %c0_i32 : i32, i32
  }
}

</mosaic_0001>

<llo_original>
// kernel: custom-call.8
$region0: #{custom-call.8}
  %s0 = inlined_call_operand.vmem [shape: f32[2,64], index: 0, kind: output, shape index: {}]

// kernel: neg.1
$region0: #{neg.1}
  #allocation0 [shape = 's32[1]{0}', space=sflag, size = 0x4, scoped, tag = 'scoped memory for neg.1']
  %s0 = inlined_call_operand.vmem [shape: f32[2,8,64], index: 0, kind: input, shape index: {}]
  %s1 = inlined_call_operand.vmem [shape: f32[2,8,64], index: 1, kind: output, shape index: {}]
  %v2 = vld [vmem:[%s0] sm:$0xff]
  %3 = xla_tuple %v2
  %4 = xla_tuple %3
  %v5 = vxor.u32 %v2, 2147483648
  %6 = xla_tuple %v5
  %7 = vst [vmem:[%s1] sm:$0xff] %v5
  %s8 = scalar_lea.vmem %s0, 8
  %v9 = vld [vmem:[%s8] sm:$0xff]
  %10 = xla_tuple %v9
  %11 = xla_tuple %10
  %v12 = vxor.u32 %v9, 2147483648
  %13 = xla_tuple %v12
  %s14 = scalar_lea.vmem %s1, 8
  %15 = vst [vmem:[%s14] sm:$0xff] %v12

// kernel: pointcloud_tokenizer.1
$region0: #{pointcloud_tokenizer.1}
  #allocation0 [shape = 'u32[]', space=smem, size = 0x4, offset = 0x4, fixed_abs, tag = 'smem constant byte address 0x4 - core index']
  #allocation1 [shape = 'u32[144,128]{1,0:T(1,128)}', space=vmem, size = 0x12000, scoped, tag = 'internal scratch']
  %s0 = inlined_call_operand.vmem [shape: f32[256,3], index: 0, kind: input, shape index: {}]
  %s1 = inlined_call_operand.vmem [shape: bf16[3,128], index: 1, kind: input, shape index: {}]
  %s2 = inlined_call_operand.vmem [shape: f32[1,128], index: 2, kind: input, shape index: {}]
  %s3 = inlined_call_operand.vmem [shape: bf16[128,256], index: 3, kind: input, shape index: {}]
  %s4 = inlined_call_operand.vmem [shape: bf16[128,512], index: 4, kind: input, shape index: {}]
  %s5 = inlined_call_operand.vmem [shape: bf16[256,512], index: 5, kind: input, shape index: {}]
  %s6 = inlined_call_operand.vmem [shape: f32[1,512], index: 6, kind: input, shape index: {}]
  %s7 = inlined_call_operand.vmem [shape: bf16[512,128], index: 7, kind: input, shape index: {}]
  %s8 = inlined_call_operand.vmem [shape: f32[1,128], index: 8, kind: input, shape index: {}]
  %s9 = inlined_call_operand.vmem [shape: f32[16,128], index: 9, kind: output, shape index: {}]
  %s10 = sld [smem:[#allocation0]]
  $region69: #{pointcloud_tokenizer.1} parent=0
    _
  %s12 = ssub.s32 1, %s10
  %s13 = scalar_select 0, %s12, %s10
  loop: start=0, step=1, limit=4
  $region2: #{pointcloud_tokenizer.1} parent=0 // loop_pre_header
    _
  $region3: #{pointcloud_tokenizer.1} parent=0 // loop_header
    %s15 = sphi 0, %s19
    %p16 = scmp.ge.s32.totalorder %s15, 4
    %s25 = sphi 0, %s27
    %s28 = sphi 0, %s25
    %s29 = sphi 0, %s28
    %s45 = sphi 0, %s29
    %s49 = sphi 0, %s49
    %s51 = sphi 0, %s49
    %s52 = sphi 0, %s51
    %s66 = sphi 0, %s52
    %s70 = sphi 0, %s70
    %s72 = sphi 0, %s70
    %s73 = sphi 0, %s72
    %s87 = sphi 0, %s73
    %s91 = sphi 0, %s91
    %s93 = sphi 0, %s91
    %s94 = sphi 0, %s93
    %s108 = sphi 0, %s94
    %s112 = sphi 0, %s112
    %s114 = sphi 0, %s112
    %s115 = sphi 0, %s114
    %s129 = sphi 0, %s115
    %s133 = sphi 0, %s133
    %s135 = sphi 0, %s133
    %s136 = sphi 0, %s135
    %s150 = sphi 0, %s136
    %s154 = sphi 0, %s154
    %s156 = sphi 0, %s154
    %s157 = sphi 0, %s156
    %s171 = sphi 0, %s157
    %s175 = sphi 0, %s175
    %s177 = sphi 0, %s175
    %s178 = sphi 0, %s177
    %s192 = sphi 0, %s178
    %s196 = sphi 0, %s196
    %s198 = sphi 0, %s196
    %s199 = sphi 0, %s198
    %s213 = sphi 0, %s199
    %s219 = sphi 0, %s221
    %s222 = sphi 0, %s219
    %s223 = sphi 0, %s222
    %s239 = sphi 0, %s223
  $region4: #{pointcloud_tokenizer.1} parent=0 // loop_header_branch
    %18 = sbr.rel (%p16) target = $region8
  $region5: #{pointcloud_tokenizer.1} parent=0 // loop_body
    %s20 = ssub.s32 %s15, 1
    %s21 = ssub.s32 %s15, 2
    %s22 = sadd.s32 %s15, 1
    %s23 = ssub.s32 %s15, %s22
    %p24 = scmp.eq.s32.totalorder %s23, 0
    %s26 = sadd.s32 %s25, 1
    %s27 = scalar_select %p24, %s25, %s26
    %p30 = pneg %p24
    %p31 = scmp.eq.s32.totalorder %s15, 1
    %p32 = por %p30, %p31
    %p33 = scmp.ne.s32.totalorder %s25, %s28
    %p34 = scmp.eq.s32.totalorder %s15, 0
    %p35 = por %p33, %p34
    %p36 = scmp.ne.s32.totalorder %s25, %s28
    %p37 = scmp.eq.s32.totalorder %s20, 1
    %p38 = por %p36, %p37
    %p39 = scmp.ne.s32.totalorder %s28, %s29
    %p40 = scmp.eq.s32.totalorder %s20, 0
    %p41 = por %p39, %p40
    %p42 = scmp.ne.s32.totalorder %s28, %s29
    %p43 = scmp.eq.s32.totalorder %s21, 1
    %p44 = por %p42, %p43
    %p46 = scmp.ne.s32.totalorder %s29, %s45
    %p47 = scmp.eq.s32.totalorder %s21, 0
    %p48 = por %p46, %p47
    %s50 = sadd.s32 %s49, 1
    %p53 = scmp.eq.s32.totalorder %s15, 1
    %p54 = scmp.ne.s32.totalorder %s49, %s51
    %p55 = scmp.eq.s32.totalorder %s15, 0
    %p56 = por %p54, %p55
    %p57 = scmp.ne.s32.totalorder %s49, %s51
    %p58 = scmp.eq.s32.totalorder %s20, 1
    %p59 = por %p57, %p58
    %p60 = scmp.ne.s32.totalorder %s51, %s52
    %p61 = scmp.eq.s32.totalorder %s20, 0
    %p62 = por %p60, %p61
    %p63 = scmp.ne.s32.totalorder %s51, %s52
    %p64 = scmp.eq.s32.totalorder %s21, 1
    %p65 = por %p63, %p64
    %p67 = scmp.ne.s32.totalorder %s52, %s66
    %p68 = scmp.eq.s32.totalorder %s21, 0
    %p69 = por %p67, %p68
    %s71 = sadd.s32 %s70, 1
    %p74 = scmp.eq.s32.totalorder %s15, 1
    %p75 = scmp.ne.s32.totalorder %s70, %s72
    %p76 = scmp.eq.s32.totalorder %s15, 0
    %p77 = por %p75, %p76
    %p78 = scmp.ne.s32.totalorder %s70, %s72
    %p79 = scmp.eq.s32.totalorder %s20, 1
    %p80 = por %p78, %p79
    %p81 = scmp.ne.s32.totalorder %s72, %s73
    %p82 = scmp.eq.s32.totalorder %s20, 0
    %p83 = por %p81, %p82
    %p84 = scmp.ne.s32.totalorder %s72, %s73
    %p85 = scmp.eq.s32.totalorder %s21, 1
    %p86 = por %p84, %p85
    %p88 = scmp.ne.s32.totalorder %s73, %s87
    %p89 = scmp.eq.s32.totalorder %s21, 0
    %p90 = por %p88, %p89
    %s92 = sadd.s32 %s91, 1
    %p95 = scmp.eq.s32.totalorder %s15, 1
    %p96 = scmp.ne.s32.totalorder %s91, %s93
    %p97 = scmp.eq.s32.totalorder %s15, 0
    %p98 = por %p96, %p97
    %p99 = scmp.ne.s32.totalorder %s91, %s93
    %p100 = scmp.eq.s32.totalorder %s20, 1
    %p101 = por %p99, %p100
    %p102 = scmp.ne.s32.totalorder %s93, %s94
    %p103 = scmp.eq.s32.totalorder %s20, 0
    %p104 = por %p102, %p103
    %p105 = scmp.ne.s32.totalorder %s93, %s94
    %p106 = scmp.eq.s32.totalorder %s21, 1
    %p107 = por %p105, %p106
    %p109 = scmp.ne.s32.totalorder %s94, %s108
    %p110 = scmp.eq.s32.totalorder %s21, 0
    %p111 = por %p109, %p110
    %s113 = sadd.s32 %s112, 1
    %p116 = scmp.eq.s32.totalorder %s15, 1
    %p117 = scmp.ne.s32.totalorder %s112, %s114
    %p118 = scmp.eq.s32.totalorder %s15, 0
    %p119 = por %p117, %p118
    %p120 = scmp.ne.s32.totalorder %s112, %s114
    %p121 = scmp.eq.s32.totalorder %s20, 1
    %p122 = por %p120, %p121
    %p123 = scmp.ne.s32.totalorder %s114, %s115
    %p124 = scmp.eq.s32.totalorder %s20, 0
    %p125 = por %p123, %p124
    %p126 = scmp.ne.s32.totalorder %s114, %s115
    %p127 = scmp.eq.s32.totalorder %s21, 1
    %p128 = por %p126, %p127
    %p130 = scmp.ne.s32.totalorder %s115, %s129
    %p131 = scmp.eq.s32.totalorder %s21, 0
    %p132 = por %p130, %p131
    %s134 = sadd.s32 %s133, 1
    %p137 = scmp.eq.s32.totalorder %s15, 1
    %p138 = scmp.ne.s32.totalorder %s133, %s135
    %p139 = scmp.eq.s32.totalorder %s15, 0
    %p140 = por %p138, %p139
    %p141 = scmp.ne.s32.totalorder %s133, %s135
    %p142 = scmp.eq.s32.totalorder %s20, 1
    %p143 = por %p141, %p142
    %p144 = scmp.ne.s32.totalorder %s135, %s136
    %p145 = scmp.eq.s32.totalorder %s20, 0
    %p146 = por %p144, %p145
    %p147 = scmp.ne.s32.totalorder %s135, %s136
    %p148 = scmp.eq.s32.totalorder %s21, 1
    %p149 = por %p147, %p148
    %p151 = scmp.ne.s32.totalorder %s136, %s150
    %p152 = scmp.eq.s32.totalorder %s21, 0
    %p153 = por %p151, %p152
    %s155 = sadd.s32 %s154, 1
    %p158 = scmp.eq.s32.totalorder %s15, 1
    %p159 = scmp.ne.s32.totalorder %s154, %s156
    %p160 = scmp.eq.s32.totalorder %s15, 0
    %p161 = por %p159, %p160
    %p162 = scmp.ne.s32.totalorder %s154, %s156
    %p163 = scmp.eq.s32.totalorder %s20, 1
    %p164 = por %p162, %p163
    %p165 = scmp.ne.s32.totalorder %s156, %s157
    %p166 = scmp.eq.s32.totalorder %s20, 0
    %p167 = por %p165, %p166
    %p168 = scmp.ne.s32.totalorder %s156, %s157
    %p169 = scmp.eq.s32.totalorder %s21, 1
    %p170 = por %p168, %p169
    %p172 = scmp.ne.s32.totalorder %s157, %s171
    %p173 = scmp.eq.s32.totalorder %s21, 0
    %p174 = por %p172, %p173
    %s176 = sadd.s32 %s175, 1
    %p179 = scmp.eq.s32.totalorder %s15, 1
    %p180 = scmp.ne.s32.totalorder %s175, %s177
    %p181 = scmp.eq.s32.totalorder %s15, 0
    %p182 = por %p180, %p181
    %p183 = scmp.ne.s32.totalorder %s175, %s177
    %p184 = scmp.eq.s32.totalorder %s20, 1
    %p185 = por %p183, %p184
    %p186 = scmp.ne.s32.totalorder %s177, %s178
    %p187 = scmp.eq.s32.totalorder %s20, 0
    %p188 = por %p186, %p187
    %p189 = scmp.ne.s32.totalorder %s177, %s178
    %p190 = scmp.eq.s32.totalorder %s21, 1
    %p191 = por %p189, %p190
    %p193 = scmp.ne.s32.totalorder %s178, %s192
    %p194 = scmp.eq.s32.totalorder %s21, 0
    %p195 = por %p193, %p194
    %s197 = sadd.s32 %s196, 1
    %p200 = scmp.eq.s32.totalorder %s15, 1
    %p201 = scmp.ne.s32.totalorder %s196, %s198
    %p202 = scmp.eq.s32.totalorder %s15, 0
    %p203 = por %p201, %p202
    %p204 = scmp.ne.s32.totalorder %s196, %s198
    %p205 = scmp.eq.s32.totalorder %s20, 1
    %p206 = por %p204, %p205
    %p207 = scmp.ne.s32.totalorder %s198, %s199
    %p208 = scmp.eq.s32.totalorder %s20, 0
    %p209 = por %p207, %p208
    %p210 = scmp.ne.s32.totalorder %s198, %s199
    %p211 = scmp.eq.s32.totalorder %s21, 1
    %p212 = por %p210, %p211
    %p214 = scmp.ne.s32.totalorder %s199, %s213
    %p215 = scmp.eq.s32.totalorder %s21, 0
    %p216 = por %p214, %p215
    %s217 = ssub.s32 %s15, %s22
    %p218 = scmp.eq.s32.totalorder %s217, 0
    %s220 = sadd.s32 %s219, 1
    %s221 = scalar_select %p218, %s219, %s220
    %p224 = pneg %p218
    %p225 = scmp.eq.s32.totalorder %s15, 1
    %p226 = por %p224, %p225
    %p227 = scmp.ne.s32.totalorder %s219, %s222
    %p228 = scmp.eq.s32.totalorder %s15, 0
    %p229 = por %p227, %p228
    %p230 = scmp.ne.s32.totalorder %s219, %s222
    %p231 = scmp.eq.s32.totalorder %s20, 1
    %p232 = por %p230, %p231
    %p233 = scmp.ne.s32.totalorder %s222, %s223
    %p234 = scmp.eq.s32.totalorder %s20, 0
    %p235 = por %p233, %p234
    %p236 = scmp.ne.s32.totalorder %s222, %s223
    %p237 = scmp.eq.s32.totalorder %s21, 1
    %p238 = por %p236, %p237
    %p240 = scmp.ne.s32.totalorder %s223, %s239
    %p241 = scmp.eq.s32.totalorder %s21, 0
    %p242 = por %p240, %p241
    %p243 = scmp.le.s32.totalorder 1, %s15
    %p244 = scmp.lt.s32.totalorder %s15, 3
    %p245 = pnand %p243, %p244
    %p246 = pneg %p245
    // Predicated region
    $region9: #{pointcloud_tokenizer.1} parent=5 // pred_check
      _
    $region10: #{pointcloud_tokenizer.1} parent=5 // pred_check_branch
      %248 = sbr.rel (%p245) target = $region12
    $region11: #{pointcloud_tokenizer.1} parent=5 // pred_region
      %s249 = ssub.s32 %s15, 1
      // Predicated region
      $region13: #{pointcloud_tokenizer.1} parent=11 // pred_check
        %p250 = pneg %p62
      $region14: #{pointcloud_tokenizer.1} parent=11 // pred_check_branch
        %252 = sbr.rel (%p250) target = $region16
      $region15: #{pointcloud_tokenizer.1} parent=11 // pred_region
        _
      $region16: #{pointcloud_tokenizer.1} parent=11 // pred_fallthru
        _
      // Predicated region
      $region17: #{pointcloud_tokenizer.1} parent=11 // pred_check
        %p253 = pneg %p83
      $region18: #{pointcloud_tokenizer.1} parent=11 // pred_check_branch
        %255 = sbr.rel (%p253) target = $region20
      $region19: #{pointcloud_tokenizer.1} parent=11 // pred_region
        _
      $region20: #{pointcloud_tokenizer.1} parent=11 // pred_fallthru
        _
      // Predicated region
      $region21: #{pointcloud_tokenizer.1} parent=11 // pred_check
        %p256 = pneg %p104
      $region22: #{pointcloud_tokenizer.1} parent=11 // pred_check_branch
        %258 = sbr.rel (%p256) target = $region24
      $region23: #{pointcloud_tokenizer.1} parent=11 // pred_region
        _
      $region24: #{pointcloud_tokenizer.1} parent=11 // pred_fallthru
        _
      // Predicated region
      $region25: #{pointcloud_tokenizer.1} parent=11 // pred_check
        %p259 = pneg %p125
      $region26: #{pointcloud_tokenizer.1} parent=11 // pred_check_branch
        %261 = sbr.rel (%p259) target = $region28
      $region27: #{pointcloud_tokenizer.1} parent=11 // pred_region
        _
      $region28: #{pointcloud_tokenizer.1} parent=11 // pred_fallthru
        _
      // Predicated region
      $region29: #{pointcloud_tokenizer.1} parent=11 // pred_check
        %p262 = pneg %p146
      $region30: #{pointcloud_tokenizer.1} parent=11 // pred_check_branch
        %264 = sbr.rel (%p262) target = $region32
      $region31: #{pointcloud_tokenizer.1} parent=11 // pred_region
        _
      $region32: #{pointcloud_tokenizer.1} parent=11 // pred_fallthru
        _
      // Predicated region
      $region33: #{pointcloud_tokenizer.1} parent=11 // pred_check
        %p265 = pneg %p167
      $region34: #{pointcloud_tokenizer.1} parent=11 // pred_check_branch
        %267 = sbr.rel (%p265) target = $region36
      $region35: #{pointcloud_tokenizer.1} parent=11 // pred_region
        _
      $region36: #{pointcloud_tokenizer.1} parent=11 // pred_fallthru
        _
      // Predicated region
      $region37: #{pointcloud_tokenizer.1} parent=11 // pred_check
        %p268 = pneg %p188
      $region38: #{pointcloud_tokenizer.1} parent=11 // pred_check_branch
        %270 = sbr.rel (%p268) target = $region40
      $region39: #{pointcloud_tokenizer.1} parent=11 // pred_region
        _
      $region40: #{pointcloud_tokenizer.1} parent=11 // pred_fallthru
        _
      // Predicated region
      $region41: #{pointcloud_tokenizer.1} parent=11 // pred_check
        %p271 = pneg %p209
      $region42: #{pointcloud_tokenizer.1} parent=11 // pred_check_branch
        %273 = sbr.rel (%p271) target = $region44
      $region43: #{pointcloud_tokenizer.1} parent=11 // pred_region
        _
      $region44: #{pointcloud_tokenizer.1} parent=11 // pred_fallthru
        _
    $region12: #{pointcloud_tokenizer.1} parent=5 // pred_fallthru
      _
    %p274 = scmp.lt.s32.totalorder %s15, 2
    // Predicated region
    $region45: #{pointcloud_tokenizer.1} parent=5 // pred_check
      %p275 = pneg %p274
    $region46: #{pointcloud_tokenizer.1} parent=5 // pred_check_branch
      %277 = sbr.rel (%p275) target = $region48
    $region47: #{pointcloud_tokenizer.1} parent=5 // pred_region
      // Predicated region
      $region49: #{pointcloud_tokenizer.1} parent=47 // pred_check
        %p278 = pneg %p35
      $region50: #{pointcloud_tokenizer.1} parent=47 // pred_check_branch
        %280 = sbr.rel (%p278) target = $region52
      $region51: #{pointcloud_tokenizer.1} parent=47 // pred_region
        %s281 = smul.u32 16, %s15
        %p282 = scmp.lt.s32.totalorder %s281, 31
        %s283 = scalar_select %p282, %s281, 31
        %s284 = smul.addr %s283, 8
        %s285 = scalar_lea.vmem %s0, %s284
        %s286 = smul.u32 16, %s15
      $region52: #{pointcloud_tokenizer.1} parent=47 // pred_fallthru
        _
    $region48: #{pointcloud_tokenizer.1} parent=5 // pred_fallthru
      _
    %p287 = scmp.le.s32.totalorder 1, %s15
    %p288 = scmp.lt.s32.totalorder %s15, 3
    %p289 = pnand %p287, %p288
    %p290 = pneg %p289
    // Predicated region
    $region53: #{pointcloud_tokenizer.1} parent=5 // pred_check
      _
    $region54: #{pointcloud_tokenizer.1} parent=5 // pred_check_branch
      %292 = sbr.rel (%p289) target = $region56
    $region55: #{pointcloud_tokenizer.1} parent=5 // pred_region
      %s293 = ssub.s32 %s15, 1
      %s294 = smul.u32 16, %s20
      %p295 = scmp.lt.s32.totalorder %s294, 31
      %s296 = scalar_select %p295, %s294, 31
      %s297 = smul.addr %s296, 8
      %s298 = scalar_lea.vmem %s0, %s297
      %p299 = pneg %p41
      %p300 = pneg %p38
      %p301 = pneg %p62
      %p302 = pneg %p59
      %p303 = pneg %p83
      %p304 = pneg %p80
      %p305 = pneg %p104
      %p306 = pneg %p101
      %p307 = pneg %p125
      %p308 = pneg %p122
      %p309 = pneg %p146
      %p310 = pneg %p143
      %p311 = pneg %p167
      %p312 = pneg %p164
      %p313 = pneg %p188
      %p314 = pneg %p185
      %p315 = pneg %p209
      %p316 = pneg %p206
      %p317 = pneg %p235
      %p318 = pneg %p232
      %p319 = scmp.lt.s32.totalorder %s20, 1
      %s320 = scalar_select %p319, %s20, 1
      %s321 = smul.addr %s320, 8
      %s322 = scalar_lea.vmem %s9, %s321
      %s323 = smul.u32 16, %s20
      %p324 = scmp.lt.s32.totalorder %s323, 31
      %s325 = scalar_select %p324, %s323, 31
      %s326 = smul.addr %s325, 8
      %s327 = scalar_lea.vmem %s0, %s326
      %s328 = smul.u32 16, %s20
      %p329 = scmp.lt.s32.totalorder %s20, 1
      %s330 = scalar_select %p329, %s20, 1
      %s331 = smul.addr %s330, 8
      %s332 = scalar_lea.vmem %s9, %s331
      %v334 = vld [vmem:[%s327] sm:$0xff]
      %v335 = vld [vmem:[%s327 + $0x8] sm:$0xff]
      %v336 = vld [vmem:[%s327 + $0x10] sm:$0xff]
      %v337 = vld [vmem:[%s327 + $0x18] sm:$0xff]
      %v338 = vld [vmem:[%s327 + $0x20] sm:$0xff]
      %v339 = vld [vmem:[%s327 + $0x28] sm:$0xff]
      %v340 = vld [vmem:[%s327 + $0x30] sm:$0xff]
      %v341 = vld [vmem:[%s327 + $0x38] sm:$0xff]
      %v342 = vld [vmem:[%s327 + $0x40] sm:$0xff]
      %v343 = vld [vmem:[%s327 + $0x48] sm:$0xff]
      %v344 = vld [vmem:[%s327 + $0x50] sm:$0xff]
      %v345 = vld [vmem:[%s327 + $0x58] sm:$0xff]
      %v346 = vld [vmem:[%s327 + $0x60] sm:$0xff]
      %v347 = vld [vmem:[%s327 + $0x68] sm:$0xff]
      %v348 = vld [vmem:[%s327 + $0x70] sm:$0xff]
      %v349 = vld [vmem:[%s327 + $0x78] sm:$0xff]
      %v350 = vpack.c.bf16 %v335, %v334
      %v351 = vpack.c.bf16 %v337, %v336
      %v352 = vpack.c.bf16 %v339, %v338
      %v353 = vpack.c.bf16 %v341, %v340
      %v354 = vpack.c.bf16 %v343, %v342
      %v355 = vpack.c.bf16 %v345, %v344
      %v356 = vpack.c.bf16 %v347, %v346
      %v357 = vpack.c.bf16 %v349, %v348
      %v358 = vld [vmem:[%s1] sm:$0x3]
      %v359 = vld [vmem:[%s2] sm:$0x1]
      %v361 = vlaneseq
      %v362 = vshrl.u32 %v361, 7
      %v363 = vsub.s32 0, %v362
      %v364 = vrot.slane %v359, %v363
      %vm366 = vcmask 23552
      %v368 = vsel %vm366, %v350, 0
      %v371 = vsel %vm366, %v351, 0
      %v374 = vsel %vm366, %v352, 0
      %v377 = vsel %vm366, %v353, 0
      %v380 = vsel %vm366, %v354, 0
      %v383 = vsel %vm366, %v355, 0
      %v386 = vsel %vm366, %v356, 0
      %v389 = vsel %vm366, %v357, 0
      %vm391 = vcmask 1040384
      %vm392 = vcmask 1041408
      %v393 = vsel %vm391, 4294967295, 65535
      %v394 = vsel %vm392, %v393, 0
      %v396 = vand.u32 %v358, %v394
      %398 = vmatprep.subr.bf16.mxu0 0
      %399 = vmatpush1.bf16.msra.mxu0 %v396
      %400 = vmatprep.subr.bf16.mxu0 0
      %401 = vmatpush1.bf16.msra.mxu0 0
      %402 = vmatprep.subr.bf16.mxu0 0
      %403 = vmatpush1.bf16.msra.mxu0 0
      %404 = vmatprep.subr.bf16.mxu0 0
      %405 = vmatpush1.bf16.msra.mxu0 0
      %406 = vmatprep.subr.bf16.mxu0 0
      %407 = vmatpush1.bf16.msra.mxu0 0
      %408 = vmatprep.subr.bf16.mxu0 0
      %409 = vmatpush1.bf16.msra.mxu0 0
      %410 = vmatprep.subr.bf16.mxu0 0
      %411 = vmatpush1.bf16.msra.mxu0 0
      %412 = vmatprep.subr.bf16.mxu0 0
      %413 = vmatpush1.bf16.msra.mxu0 0
      %414 = vmatprep.subr.bf16.mxu0 0
      %415 = vmatpush1.bf16.msra.mxu0 0
      %416 = vmatprep.subr.bf16.mxu0 0
      %417 = vmatpush1.bf16.msra.mxu0 0
      %418 = vmatprep.subr.bf16.mxu0 0
      %419 = vmatpush1.bf16.msra.mxu0 0
      %420 = vmatprep.subr.bf16.mxu0 0
      %421 = vmatpush1.bf16.msra.mxu0 0
      %422 = vmatprep.subr.bf16.mxu0 0
      %423 = vmatpush1.bf16.msra.mxu0 0
      %424 = vmatprep.subr.bf16.mxu0 0
      %425 = vmatpush1.bf16.msra.mxu0 0
      %426 = vmatprep.subr.bf16.mxu0 0
      %427 = vmatpush1.bf16.msra.mxu0 0
      %428 = vmatprep.subr.bf16.mxu0 0
      %429 = vmatpush1.bf16.msra.mxu0 0
      %430 = vmatprep.mubr.bf16.mxu0 0
      %431 = vmatmul.mubr.bf16.gmra.mrb[0].mxu0 %v368
      %v432 = vpop.f32.mrb[0].mxu0
      %v433 = vadd.f32 %v364, %v432
      %v434 = vpop.f32.mrb[0].mxu0
      %v435 = vpop.f32.mrb[0].mxu0
      %v436 = vadd.f32 %v364, %v435
      %v437 = vpop.f32.mrb[0].mxu0
      %438 = vmatprep.mubr.bf16.mxu0 0
      %439 = vmatmul.mubr.bf16.gmra.mrb[0].mxu0 %v371
      %v440 = vpop.f32.mrb[0].mxu0
      %v441 = vadd.f32 %v364, %v440
      %v442 = vpop.f32.mrb[0].mxu0
      %v443 = vpop.f32.mrb[0].mxu0
      %v444 = vadd.f32 %v364, %v443
      %v445 = vpop.f32.mrb[0].mxu0
      %446 = vmatprep.mubr.bf16.mxu0 0
      %447 = vmatmul.mubr.bf16.gmra.mrb[0].mxu0 %v374
      %v448 = vpop.f32.mrb[0].mxu0
      %v449 = vadd.f32 %v364, %v448
      %v450 = vpop.f32.mrb[0].mxu0
      %v451 = vpop.f32.mrb[0].mxu0
      %v452 = vadd.f32 %v364, %v451
      %v453 = vpop.f32.mrb[0].mxu0
      %454 = vmatprep.mubr.bf16.mxu0 0
      %455 = vmatmul.mubr.bf16.gmra.mrb[0].mxu0 %v377
      %v456 = vpop.f32.mrb[0].mxu0
      %v457 = vadd.f32 %v364, %v456
      %v458 = vpop.f32.mrb[0].mxu0
      %v459 = vpop.f32.mrb[0].mxu0
      %v460 = vadd.f32 %v364, %v459
      %v461 = vpop.f32.mrb[0].mxu0
      %462 = vmatprep.mubr.bf16.mxu0 0
      %463 = vmatmul.mubr.bf16.gmra.mrb[0].mxu0 %v380
      %v464 = vpop.f32.mrb[0].mxu0
      %v465 = vadd.f32 %v364, %v464
      %v466 = vpop.f32.mrb[0].mxu0
      %v467 = vpop.f32.mrb[0].mxu0
      %v468 = vadd.f32 %v364, %v467
      %v469 = vpop.f32.mrb[0].mxu0
      %470 = vmatprep.mubr.bf16.mxu0 0
      %471 = vmatmul.mubr.bf16.gmra.mrb[0].mxu0 %v383
      %v472 = vpop.f32.mrb[0].mxu0
      %v473 = vadd.f32 %v364, %v472
      %v474 = vpop.f32.mrb[0].mxu0
      %v475 = vpop.f32.mrb[0].mxu0
      %v476 = vadd.f32 %v364, %v475
      %v477 = vpop.f32.mrb[0].mxu0
      %478 = vmatprep.mubr.bf16.mxu0 0
      %479 = vmatmul.mubr.bf16.gmra.mrb[0].mxu0 %v386
      %v480 = vpop.f32.mrb[0].mxu0
      %v481 = vadd.f32 %v364, %v480
      %v482 = vpop.f32.mrb[0].mxu0
      %v483 = vpop.f32.mrb[0].mxu0
      %v484 = vadd.f32 %v364, %v483
      %v485 = vpop.f32.mrb[0].mxu0
      %486 = vmatprep.mubr.bf16.mxu0 0
      %487 = vmatmul.mubr.bf16.gmra.mrb[0].mxu0 %v389
      %v488 = vpop.f32.mrb[0].mxu0
      %v489 = vadd.f32 %v364, %v488
      %v490 = vpop.f32.mrb[0].mxu0
      %v491 = vpop.f32.mrb[0].mxu0
      %v492 = vadd.f32 %v364, %v491
      %v493 = vpop.f32.mrb[0].mxu0
      %494 = vdwg.mxu0
      %v495 = vmax.f32 %v433, 0.0
      %v496 = vmax.f32 %v436, 0.0
      %v497 = vmax.f32 %v441, 0.0
      %v498 = vmax.f32 %v444, 0.0
      %v499 = vmax.f32 %v449, 0.0
      %v500 = vmax.f32 %v452, 0.0
      %v501 = vmax.f32 %v457, 0.0
      %v502 = vmax.f32 %v460, 0.0
      %v503 = vmax.f32 %v465, 0.0
      %v504 = vmax.f32 %v468, 0.0
      %v505 = vmax.f32 %v473, 0.0
      %v506 = vmax.f32 %v476, 0.0
      %v507 = vmax.f32 %v481, 0.0
      %v508 = vmax.f32 %v484, 0.0
      %v509 = vmax.f32 %v489, 0.0
      %v510 = vmax.f32 %v492, 0.0
      %v511 = vpack.c.bf16 %v496, %v495
      %v512 = vpack.c.bf16 %v498, %v497
      %v513 = vpack.c.bf16 %v500, %v499
      %v514 = vpack.c.bf16 %v502, %v501
      %v515 = vpack.c.bf16 %v504, %v503
      %v516 = vpack.c.bf16 %v506, %v505
      %v517 = vpack.c.bf16 %v508, %v507
      %v518 = vpack.c.bf16 %v510, %v509
      %v519 = vld [vmem:[%s3] sm:$0xff]
      %v520 = vld [vmem:[%s3 + $0x8] sm:$0xff]
      %v521 = vld [vmem:[%s3 + $0x10] sm:$0xff]
      %v522 = vld [vmem:[%s3 + $0x18] sm:$0xff]
      %v523 = vld [vmem:[%s3 + $0x20] sm:$0xff]
      %v524 = vld [vmem:[%s3 + $0x28] sm:$0xff]
      %v525 = vld [vmem:[%s3 + $0x30] sm:$0xff]
      %v526 = vld [vmem:[%s3 + $0x38] sm:$0xff]
      %v527 = vld [vmem:[%s3 + $0x40] sm:$0xff]
      %v528 = vld [vmem:[%s3 + $0x48] sm:$0xff]
      %v529 = vld [vmem:[%s3 + $0x50] sm:$0xff]
      %v530 = vld [vmem:[%s3 + $0x58] sm:$0xff]
      %v531 = vld [vmem:[%s3 + $0x60] sm:$0xff]
      %v532 = vld [vmem:[%s3 + $0x68] sm:$0xff]
      %v533 = vld [vmem:[%s3 + $0x70] sm:$0xff]
      %v534 = vld [vmem:[%s3 + $0x78] sm:$0xff]
      %v551 = vunpack.c.l.b16 %v519
      %v552 = vunpack.c.h.b16 %v519
      %v553 = vunpack.c.l.b16 %v520
      %v554 = vunpack.c.h.b16 %v520
      %v555 = vunpack.c.l.b16 %v521
      %v556 = vunpack.c.h.b16 %v521
      %v557 = vunpack.c.l.b16 %v522
      %v558 = vunpack.c.h.b16 %v522
      %v559 = vunpack.c.l.b16 %v523
      %v560 = vunpack.c.h.b16 %v523
      %v561 = vunpack.c.l.b16 %v524
      %v562 = vunpack.c.h.b16 %v524
      %v563 = vunpack.c.l.b16 %v525
      %v564 = vunpack.c.h.b16 %v525
      %v565 = vunpack.c.l.b16 %v526
      %v566 = vunpack.c.h.b16 %v526
      %v567 = vunpack.c.l.b16 %v527
      %v568 = vunpack.c.h.b16 %v527
      %v569 = vunpack.c.l.b16 %v528
      %v570 = vunpack.c.h.b16 %v528
      %v571 = vunpack.c.l.b16 %v529
      %v572 = vunpack.c.h.b16 %v529
      %v573 = vunpack.c.l.b16 %v530
      %v574 = vunpack.c.h.b16 %v530
      %v575 = vunpack.c.l.b16 %v531
      %v576 = vunpack.c.h.b16 %v531
      %v577 = vunpack.c.l.b16 %v532
      %v578 = vunpack.c.h.b16 %v532
      %v579 = vunpack.c.l.b16 %v533
      %v580 = vunpack.c.h.b16 %v533
      %v581 = vunpack.c.l.b16 %v534
      %v582 = vunpack.c.h.b16 %v534
      %v583 = vpack.c.b16 %v553, %v551
      %v584 = vpack.c.b16 %v554, %v552
      %v585 = vpack.c.b16 %v557, %v555
      %v586 = vpack.c.b16 %v558, %v556
      %v587 = vpack.c.b16 %v561, %v559
      %v588 = vpack.c.b16 %v562, %v560
      %v589 = vpack.c.b16 %v565, %v563
      %v590 = vpack.c.b16 %v566, %v564
      %v591 = vpack.c.b16 %v569, %v567
      %v592 = vpack.c.b16 %v570, %v568
      %v593 = vpack.c.b16 %v573, %v571
      %v594 = vpack.c.b16 %v574, %v572
      %v595 = vpack.c.b16 %v577, %v575
      %v596 = vpack.c.b16 %v578, %v576
      %v597 = vpack.c.b16 %v581, %v579
      %v598 = vpack.c.b16 %v582, %v580
      %615 = vmatprep.subr.bf16.mxu0 %v584
      %616 = vmatpush1.bf16.msra.mxu0 %v583
      %617 = vmatprep.subr.bf16.mxu0 %v586
      %618 = vmatpush1.bf16.msra.mxu0 %v585
      %619 = vmatprep.subr.bf16.mxu0 %v588
      %620 = vmatpush1.bf16.msra.mxu0 %v587
      %621 = vmatprep.subr.bf16.mxu0 %v590
      %622 = vmatpush1.bf16.msra.mxu0 %v589
      %623 = vmatprep.subr.bf16.mxu0 %v592
      %624 = vmatpush1.bf16.msra.mxu0 %v591
      %625 = vmatprep.subr.bf16.mxu0 %v594
      %626 = vmatpush1.bf16.msra.mxu0 %v593
      %627 = vmatprep.subr.bf16.mxu0 %v596
      %628 = vmatpush1.bf16.msra.mxu0 %v595
      %629 = vmatprep.subr.bf16.mxu0 %v598
      %630 = vmatpush1.bf16.msra.mxu0 %v597
      %631 = vmatprep.subr.bf16.mxu0 0
      %632 = vmatpush1.bf16.msra.mxu0 0
      %633 = vmatprep.subr.bf16.mxu0 0
      %634 = vmatpush1.bf16.msra.mxu0 0
      %635 = vmatprep.subr.bf16.mxu0 0
      %636 = vmatpush1.bf16.msra.mxu0 0
      %637 = vmatprep.subr.bf16.mxu0 0
      %638 = vmatpush1.bf16.msra.mxu0 0
      %639 = vmatprep.subr.bf16.mxu0 0
      %640 = vmatpush1.bf16.msra.mxu0 0
      %641 = vmatprep.subr.bf16.mxu0 0
      %642 = vmatpush1.bf16.msra.mxu0 0
      %643 = vmatprep.subr.bf16.mxu0 0
      %644 = vmatpush1.bf16.msra.mxu0 0
      %645 = vmatprep.subr.bf16.mxu0 0
      %646 = vmatpush1.bf16.msra.mxu0 0
      %647 = vmatprep.mubr.bf16.mxu0 0
      %648 = vmatmul.mubr.bf16.gmra.mrb[0].mxu0 %v511
      %v649 = vpop.f32.mrb[0].mxu0
      %v650 = vadd.f32 0.0, %v649
      %v651 = vpop.f32.mrb[0].mxu0
      %v652 = vadd.f32 0.0, %v651
      %v653 = vpop.f32.mrb[0].mxu0
      %v654 = vadd.f32 0.0, %v653
      %v655 = vpop.f32.mrb[0].mxu0
      %v656 = vadd.f32 0.0, %v655
      %657 = vmatprep.mubr.bf16.mxu0 0
      %658 = vmatmul.mubr.bf16.gmra.mrb[0].mxu0 %v512
      %v659 = vpop.f32.mrb[0].mxu0
      %v660 = vadd.f32 0.0, %v659
      %v661 = vpop.f32.mrb[0].mxu0
      %v662 = vadd.f32 0.0, %v661
      %v663 = vpop.f32.mrb[0].mxu0
      %v664 = vadd.f32 0.0, %v663
      %v665 = vpop.f32.mrb[0].mxu0
      %v666 = vadd.f32 0.0, %v665
      %667 = vmatprep.mubr.bf16.mxu0 0
      %668 = vmatmul.mubr.bf16.gmra.mrb[0].mxu0 %v513
      %v669 = vpop.f32.mrb[0].mxu0
      %v670 = vadd.f32 0.0, %v669
      %v671 = vpop.f32.mrb[0].mxu0
      %v672 = vadd.f32 0.0, %v671
      %v673 = vpop.f32.mrb[0].mxu0
      %v674 = vadd.f32 0.0, %v673
      %v675 = vpop.f32.mrb[0].mxu0
      %v676 = vadd.f32 0.0, %v675
      %677 = vmatprep.mubr.bf16.mxu0 0
      %678 = vmatmul.mubr.bf16.gmra.mrb[0].mxu0 %v514
      %v679 = vpop.f32.mrb[0].mxu0
      %v680 = vadd.f32 0.0, %v679
      %v681 = vpop.f32.mrb[0].mxu0
      %v682 = vadd.f32 0.0, %v681
      %v683 = vpop.f32.mrb[0].mxu0
      %v684 = vadd.f32 0.0, %v683
      %v685 = vpop.f32.mrb[0].mxu0
      %v686 = vadd.f32 0.0, %v685
      %687 = vmatprep.mubr.bf16.mxu0 0
      %688 = vmatmul.mubr.bf16.gmra.mrb[0].mxu0 %v515
      %v689 = vpop.f32.mrb[0].mxu0
      %v690 = vadd.f32 0.0, %v689
      %v691 = vpop.f32.mrb[0].mxu0
      %v692 = vadd.f32 0.0, %v691
      %v693 = vpop.f32.mrb[0].mxu0
      %v694 = vadd.f32 0.0, %v693
      %v695 = vpop.f32.mrb[0].mxu0
      %v696 = vadd.f32 0.0, %v695
      %697 = vmatprep.mubr.bf16.mxu0 0
      %698 = vmatmul.mubr.bf16.gmra.mrb[0].mxu0 %v516
      %v699 = vpop.f32.mrb[0].mxu0
      %v700 = vadd.f32 0.0, %v699
      %v701 = vpop.f32.mrb[0].mxu0
      %v702 = vadd.f32 0.0, %v701
      %v703 = vpop.f32.mrb[0].mxu0
      %v704 = vadd.f32 0.0, %v703
      %v705 = vpop.f32.mrb[0].mxu0
      %v706 = vadd.f32 0.0, %v705
      %707 = vmatprep.mubr.bf16.mxu0 0
      %708 = vmatmul.mubr.bf16.gmra.mrb[0].mxu0 %v517
      %v709 = vpop.f32.mrb[0].mxu0
      %v710 = vadd.f32 0.0, %v709
      %v711 = vpop.f32.mrb[0].mxu0
      %v712 = vadd.f32 0.0, %v711
      %v713 = vpop.f32.mrb[0].mxu0
      %v714 = vadd.f32 0.0, %v713
      %v715 = vpop.f32.mrb[0].mxu0
      %v716 = vadd.f32 0.0, %v715
      %717 = vmatprep.mubr.bf16.mxu0 0
      %718 = vmatmul.mubr.bf16.gmra.mrb[0].mxu0 %v518
      %v719 = vpop.f32.mrb[0].mxu0
      %v720 = vadd.f32 0.0, %v719
      %v721 = vpop.f32.mrb[0].mxu0
      %v722 = vadd.f32 0.0, %v721
      %v723 = vpop.f32.mrb[0].mxu0
      %v724 = vadd.f32 0.0, %v723
      %v725 = vpop.f32.mrb[0].mxu0
      %v726 = vadd.f32 0.0, %v725
      %727 = vdwg.mxu0
      %v728 = vmax.f32 %v650, %v654
      %v729 = vrot.slane %v728, 4
      %v730 = vmax.f32 %v728, %v729
      %v731 = vrot.slane %v730, 2
      %v732 = vmax.f32 %v730, %v731
      %v733 = vrot.slane %v732, 1
      %v734 = vmax.f32 %v732, %v733
      %v735 = vmax.f32 %v652, %v656
      %v736 = vrot.slane %v735, 4
      %v737 = vmax.f32 %v735, %v736
      %v738 = vrot.slane %v737, 2
      %v739 = vmax.f32 %v737, %v738
      %v740 = vrot.slane %v739, 1
      %v741 = vmax.f32 %v739, %v740
      %v742 = vmax.f32 %v660, %v664
      %v743 = vrot.slane %v742, 4
      %v744 = vmax.f32 %v742, %v743
      %v745 = vrot.slane %v744, 2
      %v746 = vmax.f32 %v744, %v745
      %v747 = vrot.slane %v746, 1
      %v748 = vmax.f32 %v746, %v747
      %v749 = vmax.f32 %v662, %v666
      %v750 = vrot.slane %v749, 4
      %v751 = vmax.f32 %v749, %v750
      %v752 = vrot.slane %v751, 2
      %v753 = vmax.f32 %v751, %v752
      %v754 = vrot.slane %v753, 1
      %v755 = vmax.f32 %v753, %v754
      %v756 = vmax.f32 %v670, %v674
      %v757 = vrot.slane %v756, 4
      %v758 = vmax.f32 %v756, %v757
      %v759 = vrot.slane %v758, 2
      %v760 = vmax.f32 %v758, %v759
      %v761 = vrot.slane %v760, 1
      %v762 = vmax.f32 %v760, %v761
      %v763 = vmax.f32 %v672, %v676
      %v764 = vrot.slane %v763, 4
      %v765 = vmax.f32 %v763, %v764
      %v766 = vrot.slane %v765, 2
      %v767 = vmax.f32 %v765, %v766
      %v768 = vrot.slane %v767, 1
      %v769 = vmax.f32 %v767, %v768
      %v770 = vmax.f32 %v680, %v684
      %v771 = vrot.slane %v770, 4
      %v772 = vmax.f32 %v770, %v771
      %v773 = vrot.slane %v772, 2
      %v774 = vmax.f32 %v772, %v773
      %v775 = vrot.slane %v774, 1
      %v776 = vmax.f32 %v774, %v775
      %v777 = vmax.f32 %v682, %v686
      %v778 = vrot.slane %v777, 4
      %v779 = vmax.f32 %v777, %v778
      %v780 = vrot.slane %v779, 2
      %v781 = vmax.f32 %v779, %v780
      %v782 = vrot.slane %v781, 1
      %v783 = vmax.f32 %v781, %v782
      %v784 = vmax.f32 %v690, %v694
      %v785 = vrot.slane %v784, 4
      %v786 = vmax.f32 %v784, %v785
      %v787 = vrot.slane %v786, 2
      %v788 = vmax.f32 %v786, %v787
      %v789 = vrot.slane %v788, 1
      %v790 = vmax.f32 %v788, %v789
      %v791 = vmax.f32 %v692, %v696
      %v792 = vrot.slane %v791, 4
      %v793 = vmax.f32 %v791, %v792
      %v794 = vrot.slane %v793, 2
      %v795 = vmax.f32 %v793, %v794
      %v796 = vrot.slane %v795, 1
      %v797 = vmax.f32 %v795, %v796
      %v798 = vmax.f32 %v700, %v704
      %v799 = vrot.slane %v798, 4
      %v800 = vmax.f32 %v798, %v799
      %v801 = vrot.slane %v800, 2
      %v802 = vmax.f32 %v800, %v801
      %v803 = vrot.slane %v802, 1
      %v804 = vmax.f32 %v802, %v803
      %v805 = vmax.f32 %v702, %v706
      %v806 = vrot.slane %v805, 4
      %v807 = vmax.f32 %v805, %v806
      %v808 = vrot.slane %v807, 2
      %v809 = vmax.f32 %v807, %v808
      %v810 = vrot.slane %v809, 1
      %v811 = vmax.f32 %v809, %v810
      %v812 = vmax.f32 %v710, %v714
      %v813 = vrot.slane %v812, 4
      %v814 = vmax.f32 %v812, %v813
      %v815 = vrot.slane %v814, 2
      %v816 = vmax.f32 %v814, %v815
      %v817 = vrot.slane %v816, 1
      %v818 = vmax.f32 %v816, %v817
      %v819 = vmax.f32 %v712, %v716
      %v820 = vrot.slane %v819, 4
      %v821 = vmax.f32 %v819, %v820
      %v822 = vrot.slane %v821, 2
      %v823 = vmax.f32 %v821, %v822
      %v824 = vrot.slane %v823, 1
      %v825 = vmax.f32 %v823, %v824
      %v826 = vmax.f32 %v720, %v724
      %v827 = vrot.slane %v826, 4
      %v828 = vmax.f32 %v826, %v827
      %v829 = vrot.slane %v828, 2
      %v830 = vmax.f32 %v828, %v829
      %v831 = vrot.slane %v830, 1
      %v832 = vmax.f32 %v830, %v831
      %v833 = vmax.f32 %v722, %v726
      %v834 = vrot.slane %v833, 4
      %v835 = vmax.f32 %v833, %v834
      %v836 = vrot.slane %v835, 2
      %v837 = vmax.f32 %v835, %v836
      %v838 = vrot.slane %v837, 1
      %v839 = vmax.f32 %v837, %v838
      %v840 = vld [vmem:[%s4] sm:$0xff]
      %v841 = vld [vmem:[%s4 + $0x8] sm:$0xff]
      %v842 = vld [vmem:[%s4 + $0x10] sm:$0xff]
      %v843 = vld [vmem:[%s4 + $0x18] sm:$0xff]
      %v844 = vld [vmem:[%s4 + $0x20] sm:$0xff]
      %v845 = vld [vmem:[%s4 + $0x28] sm:$0xff]
      %v846 = vld [vmem:[%s4 + $0x30] sm:$0xff]
      %v847 = vld [vmem:[%s4 + $0x38] sm:$0xff]
      %v848 = vld [vmem:[%s4 + $0x40] sm:$0xff]
      %v849 = vld [vmem:[%s4 + $0x48] sm:$0xff]
      %v850 = vld [vmem:[%s4 + $0x50] sm:$0xff]
      %v851 = vld [vmem:[%s4 + $0x58] sm:$0xff]
      %v852 = vld [vmem:[%s4 + $0x60] sm:$0xff]
      %v853 = vld [vmem:[%s4 + $0x68] sm:$0xff]
      %v854 = vld [vmem:[%s4 + $0x70] sm:$0xff]
      %v855 = vld [vmem:[%s4 + $0x78] sm:$0xff]
      %v856 = vld [vmem:[%s4 + $0x80] sm:$0xff]
      %v857 = vld [vmem:[%s4 + $0x88] sm:$0xff]
      %v858 = vld [vmem:[%s4 + $0x90] sm:$0xff]
      %v859 = vld [vmem:[%s4 + $0x98] sm:$0xff]
      %v860 = vld [vmem:[%s4 + $0xa0] sm:$0xff]
      %v861 = vld [vmem:[%s4 + $0xa8] sm:$0xff]
      %v862 = vld [vmem:[%s4 + $0xb0] sm:$0xff]
      %v863 = vld [vmem:[%s4 + $0xb8] sm:$0xff]
      %v864 = vld [vmem:[%s4 + $0xc0] sm:$0xff]
      %v865 = vld [vmem:[%s4 + $0xc8] sm:$0xff]
      %v866 = vld [vmem:[%s4 + $0xd0] sm:$0xff]
      %v867 = vld [vmem:[%s4 + $0xd8] sm:$0xff]
      %v868 = vld [vmem:[%s4 + $0xe0] sm:$0xff]
      %v869 = vld [vmem:[%s4 + $0xe8] sm:$0xff]
      %v870 = vld [vmem:[%s4 + $0xf0] sm:$0xff]
      %v871 = vld [vmem:[%s4 + $0xf8] sm:$0xff]
      %v904 = vunpack.c.l.b16 %v840
      %v905 = vunpack.c.h.b16 %v840
      %v906 = vunpack.c.l.b16 %v841
      %v907 = vunpack.c.h.b16 %v841
      %v908 = vunpack.c.l.b16 %v842
      %v909 = vunpack.c.h.b16 %v842
      %v910 = vunpack.c.l.b16 %v843
      %v911 = vunpack.c.h.b16 %v843
      %v912 = vunpack.c.l.b16 %v844
      %v913 = vunpack.c.h.b16 %v844
      %v914 = vunpack.c.l.b16 %v845
      %v915 = vunpack.c.h.b16 %v845
      %v916 = vunpack.c.l.b16 %v846
      %v917 = vunpack.c.h.b16 %v846
      %v918 = vunpack.c.l.b16 %v847
      %v919 = vunpack.c.h.b16 %v847
      %v920 = vunpack.c.l.b16 %v848
      %v921 = vunpack.c.h.b16 %v848
      %v922 = vunpack.c.l.b16 %v849
      %v923 = vunpack.c.h.b16 %v849
      %v924 = vunpack.c.l.b16 %v850
      %v925 = vunpack.c.h.b16 %v850
      %v926 = vunpack.c.l.b16 %v851
      %v927 = vunpack.c.h.b16 %v851
      %v928 = vunpack.c.l.b16 %v852
      %v929 = vunpack.c.h.b16 %v852
      %v930 = vunpack.c.l.b16 %v853
      %v931 = vunpack.c.h.b16 %v853
      %v932 = vunpack.c.l.b16 %v854
      %v933 = vunpack.c.h.b16 %v854
      %v934 = vunpack.c.l.b16 %v855
      %v935 = vunpack.c.h.b16 %v855
      %v936 = vunpack.c.l.b16 %v856
      %v937 = vunpack.c.h.b16 %v856
      %v938 = vunpack.c.l.b16 %v857
      %v939 = vunpack.c.h.b16 %v857
      %v940 = vunpack.c.l.b16 %v858
      %v941 = vunpack.c.h.b16 %v858
      %v942 = vunpack.c.l.b16 %v859
      %v943 = vunpack.c.h.b16 %v859
      %v944 = vunpack.c.l.b16 %v860
      %v945 = vunpack.c.h.b16 %v860
      %v946 = vunpack.c.l.b16 %v861
      %v947 = vunpack.c.h.b16 %v861
      %v948 = vunpack.c.l.b16 %v862
      %v949 = vunpack.c.h.b16 %v862
      %v950 = vunpack.c.l.b16 %v863
      %v951 = vunpack.c.h.b16 %v863
      %v952 = vunpack.c.l.b16 %v864
      %v953 = vunpack.c.h.b16 %v864
      %v954 = vunpack.c.l.b16 %v865
      %v955 = vunpack.c.h.b16 %v865
      %v956 = vunpack.c.l.b16 %v866
      %v957 = vunpack.c.h.b16 %v866
      %v958 = vunpack.c.l.b16 %v867
      %v959 = vunpack.c.h.b16 %v867
      %v960 = vunpack.c.l.b16 %v868
      %v961 = vunpack.c.h.b16 %v868
      %v962 = vunpack.c.l.b16 %v869
      %v963 = vunpack.c.h.b16 %v869
      %v964 = vunpack.c.l.b16 %v870
      %v965 = vunpack.c.h.b16 %v870
      %v966 = vunpack.c.l.b16 %v871
      %v967 = vunpack.c.h.b16 %v871
      %v968 = vpack.c.b16 %v908, %v904
      %v969 = vpack.c.b16 %v909, %v905
      %v970 = vpack.c.b16 %v910, %v906
      %v971 = vpack.c.b16 %v911, %v907
      %v972 = vpack.c.b16 %v916, %v912
      %v973 = vpack.c.b16 %v917, %v913
      %v974 = vpack.c.b16 %v918, %v914
      %v975 = vpack.c.b16 %v919, %v915
      %v976 = vpack.c.b16 %v924, %v920
      %v977 = vpack.c.b16 %v925, %v921
      %v978 = vpack.c.b16 %v926, %v922
      %v979 = vpack.c.b16 %v927, %v923
      %v980 = vpack.c.b16 %v932, %v928
      %v981 = vpack.c.b16 %v933, %v929
      %v982 = vpack.c.b16 %v934, %v930
      %v983 = vpack.c.b16 %v935, %v931
      %v984 = vpack.c.b16 %v940, %v936
      %v985 = vpack.c.b16 %v941, %v937
      %v986 = vpack.c.b16 %v942, %v938
      %v987 = vpack.c.b16 %v943, %v939
      %v988 = vpack.c.b16 %v948, %v944
      %v989 = vpack.c.b16 %v949, %v945
      %v990 = vpack.c.b16 %v950, %v946
      %v991 = vpack.c.b16 %v951, %v947
      %v992 = vpack.c.b16 %v956, %v952
      %v993 = vpack.c.b16 %v957, %v953
      %v994 = vpack.c.b16 %v958, %v954
      %v995 = vpack.c.b16 %v959, %v955
      %v996 = vpack.c.b16 %v964, %v960
      %v997 = vpack.c.b16 %v965, %v961
      %v998 = vpack.c.b16 %v966, %v962
      %v999 = vpack.c.b16 %v967, %v963
      %1032 = vmatprep.subr.bf16.mxu0 %v969
      %1033 = vmatpush1.bf16.msra.mxu0 %v968
      %1034 = vmatprep.subr.bf16.mxu0 %v973
      %1035 = vmatpush1.bf16.msra.mxu0 %v972
      %1036 = vmatprep.subr.bf16.mxu0 %v977
      %1037 = vmatpush1.bf16.msra.mxu0 %v976
      %1038 = vmatprep.subr.bf16.mxu0 %v981
      %1039 = vmatpush1.bf16.msra.mxu0 %v980
      %1040 = vmatprep.subr.bf16.mxu0 %v985
      %1041 = vmatpush1.bf16.msra.mxu0 %v984
      %1042 = vmatprep.subr.bf16.mxu0 %v989
      %1043 = vmatpush1.bf16.msra.mxu0 %v988
      %1044 = vmatprep.subr.bf16.mxu0 %v993
      %1045 = vmatpush1.bf16.msra.mxu0 %v992
      %1046 = vmatprep.subr.bf16.mxu0 %v997
      %1047 = vmatpush1.bf16.msra.mxu0 %v996
      %1048 = vmatprep.subr.bf16.mxu0 0
      %1049 = vmatpush1.bf16.msra.mxu0 0
      %1050 = vmatprep.subr.bf16.mxu0 0
      %1051 = vmatpush1.bf16.msra.mxu0 0
      %1052 = vmatprep.subr.bf16.mxu0 0
      %1053 = vmatpush1.bf16.msra.mxu0 0
      %1054 = vmatprep.subr.bf16.mxu0 0
      %1055 = vmatpush1.bf16.msra.mxu0 0
      %1056 = vmatprep.subr.bf16.mxu0 0
      %1057 = vmatpush1.bf16.msra.mxu0 0
      %1058 = vmatprep.subr.bf16.mxu0 0
      %1059 = vmatpush1.bf16.msra.mxu0 0
      %1060 = vmatprep.subr.bf16.mxu0 0
      %1061 = vmatpush1.bf16.msra.mxu0 0
      %1062 = vmatprep.subr.bf16.mxu0 0
      %1063 = vmatpush1.bf16.msra.mxu0 0
      %1064 = vmatprep.mubr.bf16.mxu0 0
      %1065 = vmatmul.mubr.bf16.gmra.mrb[0].mxu0 %v511
      %v1066 = vpop.f32.mrb[0].mxu0
      %v1067 = vadd.f32 0.0, %v1066
      %v1068 = vpop.f32.mrb[0].mxu0
      %v1069 = vadd.f32 0.0, %v1068
      %v1070 = vpop.f32.mrb[0].mxu0
      %v1071 = vadd.f32 0.0, %v1070
      %v1072 = vpop.f32.mrb[0].mxu0
      %v1073 = vadd.f32 0.0, %v1072
      %1074 = vmatprep.mubr.bf16.mxu0 0
      %1075 = vmatmul.mubr.bf16.gmra.mrb[0].mxu0 %v512
      %v1076 = vpop.f32.mrb[0].mxu0
      %v1077 = vadd.f32 0.0, %v1076
      %v1078 = vpop.f32.mrb[0].mxu0
      %v1079 = vadd.f32 0.0, %v1078
      %v1080 = vpop.f32.mrb[0].mxu0
      %v1081 = vadd.f32 0.0, %v1080
      %v1082 = vpop.f32.mrb[0].mxu0
      %v1083 = vadd.f32 0.0, %v1082
      %1084 = vmatprep.mubr.bf16.mxu0 0
      %1085 = vmatmul.mubr.bf16.gmra.mrb[0].mxu0 %v513
      %v1086 = vpop.f32.mrb[0].mxu0
      %v1087 = vadd.f32 0.0, %v1086
      %v1088 = vpop.f32.mrb[0].mxu0
      %v1089 = vadd.f32 0.0, %v1088
      %v1090 = vpop.f32.mrb[0].mxu0
      %v1091 = vadd.f32 0.0, %v1090
      %v1092 = vpop.f32.mrb[0].mxu0
      %v1093 = vadd.f32 0.0, %v1092
      %1094 = vmatprep.mubr.bf16.mxu0 0
      %1095 = vmatmul.mubr.bf16.gmra.mrb[0].mxu0 %v514
      %v1096 = vpop.f32.mrb[0].mxu0
      %v1097 = vadd.f32 0.0, %v1096
      %v1098 = vpop.f32.mrb[0].mxu0
      %v1099 = vadd.f32 0.0, %v1098
      %v1100 = vpop.f32.mrb[0].mxu0
      %v1101 = vadd.f32 0.0, %v1100
      %v1102 = vpop.f32.mrb[0].mxu0
      %v1103 = vadd.f32 0.0, %v1102
      %1104 = vmatprep.mubr.bf16.mxu0 0
      %1105 = vmatmul.mubr.bf16.gmra.mrb[0].mxu0 %v515
      %v1106 = vpop.f32.mrb[0].mxu0
      %v1107 = vadd.f32 0.0, %v1106
      %v1108 = vpop.f32.mrb[0].mxu0
      %v1109 = vadd.f32 0.0, %v1108
      %v1110 = vpop.f32.mrb[0].mxu0
      %v1111 = vadd.f32 0.0, %v1110
      %v1112 = vpop.f32.mrb[0].mxu0
      %v1113 = vadd.f32 0.0, %v1112
      %1114 = vmatprep.mubr.bf16.mxu0 0
      %1115 = vmatmul.mubr.bf16.gmra.mrb[0].mxu0 %v516
      %v1116 = vpop.f32.mrb[0].mxu0
      %v1117 = vadd.f32 0.0, %v1116
      %v1118 = vpop.f32.mrb[0].mxu0
      %v1119 = vadd.f32 0.0, %v1118
      %v1120 = vpop.f32.mrb[0].mxu0
      %v1121 = vadd.f32 0.0, %v1120
      %v1122 = vpop.f32.mrb[0].mxu0
      %v1123 = vadd.f32 0.0, %v1122
      %1124 = vmatprep.mubr.bf16.mxu0 0
      %1125 = vmatmul.mubr.bf16.gmra.mrb[0].mxu0 %v517
      %v1126 = vpop.f32.mrb[0].mxu0
      %v1127 = vadd.f32 0.0, %v1126
      %v1128 = vpop.f32.mrb[0].mxu0
      %v1129 = vadd.f32 0.0, %v1128
      %v1130 = vpop.f32.mrb[0].mxu0
      %v1131 = vadd.f32 0.0, %v1130
      %v1132 = vpop.f32.mrb[0].mxu0
      %v1133 = vadd.f32 0.0, %v1132
      %1134 = vmatprep.mubr.bf16.mxu0 0
      %1135 = vmatmul.mubr.bf16.gmra.mrb[0].mxu0 %v518
      %v1136 = vpop.f32.mrb[0].mxu0
      %v1137 = vadd.f32 0.0, %v1136
      %v1138 = vpop.f32.mrb[0].mxu0
      %v1139 = vadd.f32 0.0, %v1138
      %v1140 = vpop.f32.mrb[0].mxu0
      %v1141 = vadd.f32 0.0, %v1140
      %v1142 = vpop.f32.mrb[0].mxu0
      %v1143 = vadd.f32 0.0, %v1142
      %1144 = vdwg.mxu0
      %1145 = vmatprep.subr.bf16.mxu0 %v971
      %1146 = vmatpush1.bf16.msra.mxu0 %v970
      %1147 = vmatprep.subr.bf16.mxu0 %v975
      %1148 = vmatpush1.bf16.msra.mxu0 %v974
      %1149 = vmatprep.subr.bf16.mxu0 %v979
      %1150 = vmatpush1.bf16.msra.mxu0 %v978
      %1151 = vmatprep.subr.bf16.mxu0 %v983
      %1152 = vmatpush1.bf16.msra.mxu0 %v982
      %1153 = vmatprep.subr.bf16.mxu0 %v987
      %1154 = vmatpush1.bf16.msra.mxu0 %v986
      %1155 = vmatprep.subr.bf16.mxu0 %v991
      %1156 = vmatpush1.bf16.msra.mxu0 %v990
      %1157 = vmatprep.subr.bf16.mxu0 %v995
      %1158 = vmatpush1.bf16.msra.mxu0 %v994
      %1159 = vmatprep.subr.bf16.mxu0 %v999
      %1160 = vmatpush1.bf16.msra.mxu0 %v998
      %1161 = vmatprep.subr.bf16.mxu0 0
      %1162 = vmatpush1.bf16.msra.mxu0 0
      %1163 = vmatprep.subr.bf16.mxu0 0
      %1164 = vmatpush1.bf16.msra.mxu0 0
      %1165 = vmatprep.subr.bf16.mxu0 0
      %1166 = vmatpush1.bf16.msra.mxu0 0
      %1167 = vmatprep.subr.bf16.mxu0 0
      %1168 = vmatpush1.bf16.msra.mxu0 0
      %1169 = vmatprep.subr.bf16.mxu0 0
      %1170 = vmatpush1.bf16.msra.mxu0 0
      %1171 = vmatprep.subr.bf16.mxu0 0
      %1172 = vmatpush1.bf16.msra.mxu0 0
      %1173 = vmatprep.subr.bf16.mxu0 0
      %1174 = vmatpush1.bf16.msra.mxu0 0
      %1175 = vmatprep.subr.bf16.mxu0 0
      %1176 = vmatpush1.bf16.msra.mxu0 0
      %1177 = vmatprep.mubr.bf16.mxu0 0
      %1178 = vmatmul.mubr.bf16.gmra.mrb[0].mxu0 %v511
      %v1179 = vpop.f32.mrb[0].mxu0
      %v1180 = vadd.f32 0.0, %v1179
      %v1181 = vpop.f32.mrb[0].mxu0
      %v1182 = vadd.f32 0.0, %v1181
      %v1183 = vpop.f32.mrb[0].mxu0
      %v1184 = vadd.f32 0.0, %v1183
      %v1185 = vpop.f32.mrb[0].mxu0
      %v1186 = vadd.f32 0.0, %v1185
      %1187 = vmatprep.mubr.bf16.mxu0 0
      %1188 = vmatmul.mubr.bf16.gmra.mrb[0].mxu0 %v512
      %v1189 = vpop.f32.mrb[0].mxu0
      %v1190 = vadd.f32 0.0, %v1189
      %v1191 = vpop.f32.mrb[0].mxu0
      %v1192 = vadd.f32 0.0, %v1191
      %v1193 = vpop.f32.mrb[0].mxu0
      %v1194 = vadd.f32 0.0, %v1193
      %v1195 = vpop.f32.mrb[0].mxu0
      %v1196 = vadd.f32 0.0, %v1195
      %1197 = vmatprep.mubr.bf16.mxu0 0
      %1198 = vmatmul.mubr.bf16.gmra.mrb[0].mxu0 %v513
      %v1199 = vpop.f32.mrb[0].mxu0
      %v1200 = vadd.f32 0.0, %v1199
      %v1201 = vpop.f32.mrb[0].mxu0
      %v1202 = vadd.f32 0.0, %v1201
      %v1203 = vpop.f32.mrb[0].mxu0
      %v1204 = vadd.f32 0.0, %v1203
      %v1205 = vpop.f32.mrb[0].mxu0
      %v1206 = vadd.f32 0.0, %v1205
      %1207 = vmatprep.mubr.bf16.mxu0 0
      %1208 = vmatmul.mubr.bf16.gmra.mrb[0].mxu0 %v514
      %v1209 = vpop.f32.mrb[0].mxu0
      %v1210 = vadd.f32 0.0, %v1209
      %v1211 = vpop.f32.mrb[0].mxu0
      %v1212 = vadd.f32 0.0, %v1211
      %v1213 = vpop.f32.mrb[0].mxu0
      %v1214 = vadd.f32 0.0, %v1213
      %v1215 = vpop.f32.mrb[0].mxu0
      %v1216 = vadd.f32 0.0, %v1215
      %1217 = vmatprep.mubr.bf16.mxu0 0
      %1218 = vmatmul.mubr.bf16.gmra.mrb[0].mxu0 %v515
      %v1219 = vpop.f32.mrb[0].mxu0
      %v1220 = vadd.f32 0.0, %v1219
      %v1221 = vpop.f32.mrb[0].mxu0
      %v1222 = vadd.f32 0.0, %v1221
      %v1223 = vpop.f32.mrb[0].mxu0
      %v1224 = vadd.f32 0.0, %v1223
      %v1225 = vpop.f32.mrb[0].mxu0
      %v1226 = vadd.f32 0.0, %v1225
      %1227 = vmatprep.mubr.bf16.mxu0 0
      %1228 = vmatmul.mubr.bf16.gmra.mrb[0].mxu0 %v516
      %v1229 = vpop.f32.mrb[0].mxu0
      %v1230 = vadd.f32 0.0, %v1229
      %v1231 = vpop.f32.mrb[0].mxu0
      %v1232 = vadd.f32 0.0, %v1231
      %v1233 = vpop.f32.mrb[0].mxu0
      %v1234 = vadd.f32 0.0, %v1233
      %v1235 = vpop.f32.mrb[0].mxu0
      %v1236 = vadd.f32 0.0, %v1235
      %1237 = vmatprep.mubr.bf16.mxu0 0
      %1238 = vmatmul.mubr.bf16.gmra.mrb[0].mxu0 %v517
      %v1239 = vpop.f32.mrb[0].mxu0
      %v1240 = vadd.f32 0.0, %v1239
      %v1241 = vpop.f32.mrb[0].mxu0
      %v1242 = vadd.f32 0.0, %v1241
      %v1243 = vpop.f32.mrb[0].mxu0
      %v1244 = vadd.f32 0.0, %v1243
      %v1245 = vpop.f32.mrb[0].mxu0
      %v1246 = vadd.f32 0.0, %v1245
      %1247 = vmatprep.mubr.bf16.mxu0 0
      %1248 = vmatmul.mubr.bf16.gmra.mrb[0].mxu0 %v518
      %v1249 = vpop.f32.mrb[0].mxu0
      %v1250 = vadd.f32 0.0, %v1249
      %v1251 = vpop.f32.mrb[0].mxu0
      %v1252 = vadd.f32 0.0, %v1251
      %v1253 = vpop.f32.mrb[0].mxu0
      %v1254 = vadd.f32 0.0, %v1253
      %v1255 = vpop.f32.mrb[0].mxu0
      %v1256 = vadd.f32 0.0, %v1255
      %1257 = vdwg.mxu0
      %v1258 = vpack.c.bf16 %v734, %v734
      %v1259 = vpack.c.bf16 %v741, %v741
      %v1260 = vpack.c.bf16 %v748, %v748
      %v1261 = vpack.c.bf16 %v755, %v755
      %v1262 = vpack.c.bf16 %v762, %v762
      %v1263 = vpack.c.bf16 %v769, %v769
      %v1264 = vpack.c.bf16 %v776, %v776
      %v1265 = vpack.c.bf16 %v783, %v783
      %v1266 = vpack.c.bf16 %v790, %v790
      %v1267 = vpack.c.bf16 %v797, %v797
      %v1268 = vpack.c.bf16 %v804, %v804
      %v1269 = vpack.c.bf16 %v811, %v811
      %v1270 = vpack.c.bf16 %v818, %v818
      %v1271 = vpack.c.bf16 %v825, %v825
      %v1272 = vpack.c.bf16 %v832, %v832
      %v1273 = vpack.c.bf16 %v839, %v839
      %v1274 = vld [vmem:[%s5] sm:$0xff]
      %v1275 = vld [vmem:[%s5 + $0x8] sm:$0xff]
      %v1276 = vld [vmem:[%s5 + $0x10] sm:$0xff]
      %v1277 = vld [vmem:[%s5 + $0x18] sm:$0xff]
      %v1278 = vld [vmem:[%s5 + $0x20] sm:$0xff]
      %v1279 = vld [vmem:[%s5 + $0x28] sm:$0xff]
      %v1280 = vld [vmem:[%s5 + $0x30] sm:$0xff]
      %v1281 = vld [vmem:[%s5 + $0x38] sm:$0xff]
      %v1282 = vld [vmem:[%s5 + $0x40] sm:$0xff]
      %v1283 = vld [vmem:[%s5 + $0x48] sm:$0xff]
      %v1284 = vld [vmem:[%s5 + $0x50] sm:$0xff]
      %v1285 = vld [vmem:[%s5 + $0x58] sm:$0xff]
      %v1286 = vld [vmem:[%s5 + $0x60] sm:$0xff]
      %v1287 = vld [vmem:[%s5 + $0x68] sm:$0xff]
      %v1288 = vld [vmem:[%s5 + $0x70] sm:$0xff]
      %v1289 = vld [vmem:[%s5 + $0x78] sm:$0xff]
      %v1290 = vld [vmem:[%s5 + $0x80] sm:$0xff]
      %v1291 = vld [vmem:[%s5 + $0x88] sm:$0xff]
      %v1292 = vld [vmem:[%s5 + $0x90] sm:$0xff]
      %v1293 = vld [vmem:[%s5 + $0x98] sm:$0xff]
      %v1294 = vld [vmem:[%s5 + $0xa0] sm:$0xff]
      %v1295 = vld [vmem:[%s5 + $0xa8] sm:$0xff]
      %v1296 = vld [vmem:[%s5 + $0xb0] sm:$0xff]
      %v1297 = vld [vmem:[%s5 + $0xb8] sm:$0xff]
      %v1298 = vld [vmem:[%s5 + $0xc0] sm:$0xff]
      %v1299 = vld [vmem:[%s5 + $0xc8] sm:$0xff]
      %v1300 = vld [vmem:[%s5 + $0xd0] sm:$0xff]
      %v1301 = vld [vmem:[%s5 + $0xd8] sm:$0xff]
      %v1302 = vld [vmem:[%s5 + $0xe0] sm:$0xff]
      %v1303 = vld [vmem:[%s5 + $0xe8] sm:$0xff]
      %v1304 = vld [vmem:[%s5 + $0xf0] sm:$0xff]
      %v1305 = vld [vmem:[%s5 + $0xf8] sm:$0xff]
      %v1306 = vld [vmem:[%s5 + $0x100] sm:$0xff]
      %v1307 = vld [vmem:[%s5 + $0x108] sm:$0xff]
      %v1308 = vld [vmem:[%s5 + $0x110] sm:$0xff]
      %v1309 = vld [vmem:[%s5 + $0x118] sm:$0xff]
      %v1310 = vld [vmem:[%s5 + $0x120] sm:$0xff]
      %v1311 = vld [vmem:[%s5 + $0x128] sm:$0xff]
      %v1312 = vld [vmem:[%s5 + $0x130] sm:$0xff]
      %v1313 = vld [vmem:[%s5 + $0x138] sm:$0xff]
      %v1314 = vld [vmem:[%s5 + $0x140] sm:$0xff]
      %v1315 = vld [vmem:[%s5 + $0x148] sm:$0xff]
      %v1316 = vld [vmem:[%s5 + $0x150] sm:$0xff]
      %v1317 = vld [vmem:[%s5 + $0x158] sm:$0xff]
      %v1318 = vld [vmem:[%s5 + $0x160] sm:$0xff]
      %v1319 = vld [vmem:[%s5 + $0x168] sm:$0xff]
      %v1320 = vld [vmem:[%s5 + $0x170] sm:$0xff]
      %v1321 = vld [vmem:[%s5 + $0x178] sm:$0xff]
      %v1322 = vld [vmem:[%s5 + $0x180] sm:$0xff]
      %v1323 = vld [vmem:[%s5 + $0x188] sm:$0xff]
      %v1324 = vld [vmem:[%s5 + $0x190] sm:$0xff]
      %v1325 = vld [vmem:[%s5 + $0x198] sm:$0xff]
      %v1326 = vld [vmem:[%s5 + $0x1a0] sm:$0xff]
      %v1327 = vld [vmem:[%s5 + $0x1a8] sm:$0xff]
      %v1328 = vld [vmem:[%s5 + $0x1b0] sm:$0xff]
      %v1329 = vld [vmem:[%s5 + $0x1b8] sm:$0xff]
      %v1330 = vld [vmem:[%s5 + $0x1c0] sm:$0xff]
      %v1331 = vld [vmem:[%s5 + $0x1c8] sm:$0xff]
      %v1332 = vld [vmem:[%s5 + $0x1d0] sm:$0xff]
      %v1333 = vld [vmem:[%s5 + $0x1d8] sm:$0xff]
      %v1334 = vld [vmem:[%s5 + $0x1e0] sm:$0xff]
      %v1335 = vld [vmem:[%s5 + $0x1e8] sm:$0xff]
      %v1336 = vld [vmem:[%s5 + $0x1f0] sm:$0xff]
      %v1337 = vld [vmem:[%s5 + $0x1f8] sm:$0xff]
      %v1338 = vld [vmem:[%s6] sm:$0xf]
      %v1340 = vlaneseq
      %v1341 = vshrl.u32 %v1340, 7
      %v1342 = vsub.s32 0, %v1341
      %v1343 = vrot.slane %v1338, %v1342
      %v1344 = vlaneseq
      %v1345 = vshrl.u32 %v1344, 7
      %v1346 = vsub.s32 1, %v1345
      %v1347 = vrot.slane %v1338, %v1346
      %v1348 = vlaneseq
      %v1349 = vshrl.u32 %v1348, 7
      %v1350 = vsub.s32 2, %v1349
      %v1351 = vrot.slane %v1338, %v1350
      %v1352 = vlaneseq
      %v1353 = vshrl.u32 %v1352, 7
      %v1354 = vsub.s32 3, %v1353
      %v1355 = vrot.slane %v1338, %v1354
      %v1376 = vunpack.c.l.b16 %v1258
      %v1377 = vunpack.c.l.b16 %v1259
      %v1378 = vunpack.c.l.b16 %v1260
      %v1379 = vunpack.c.l.b16 %v1261
      %v1380 = vunpack.c.l.b16 %v1262
      %v1381 = vunpack.c.l.b16 %v1263
      %v1382 = vunpack.c.l.b16 %v1264
      %v1383 = vunpack.c.l.b16 %v1265
      %v1384 = vunpack.c.l.b16 %v1266
      %v1385 = vunpack.c.l.b16 %v1267
      %v1386 = vunpack.c.l.b16 %v1268
      %v1387 = vunpack.c.l.b16 %v1269
      %v1388 = vunpack.c.l.b16 %v1270
      %v1389 = vunpack.c.l.b16 %v1271
      %v1390 = vunpack.c.l.b16 %v1272
      %v1391 = vunpack.c.l.b16 %v1273
      %vm1392 = vcmask 1041409
      %v1393 = vsel %vm1392, %v1378, %v1376
      %vm1394 = vcmask 1042434
      %v1395 = vsel %vm1394, %v1380, %v1393
      %vm1396 = vcmask 1043459
      %v1397 = vsel %vm1396, %v1382, %v1395
      %vm1398 = vcmask 1044484
      %v1399 = vsel %vm1398, %v1384, %v1397
      %vm1400 = vcmask 1045509
      %v1401 = vsel %vm1400, %v1386, %v1399
      %vm1402 = vcmask 1046534
      %v1403 = vsel %vm1402, %v1388, %v1401
      %vm1404 = vcmask 1047559
      %v1405 = vsel %vm1404, %v1390, %v1403
      %v1406 = vsel %vm1392, %v1379, %v1377
      %v1407 = vsel %vm1394, %v1381, %v1406
      %v1408 = vsel %vm1396, %v1383, %v1407
      %v1409 = vsel %vm1398, %v1385, %v1408
      %v1410 = vsel %vm1400, %v1387, %v1409
      %v1411 = vsel %vm1402, %v1389, %v1410
      %v1412 = vsel %vm1404, %v1391, %v1411
      %v1413 = vpack.c.b16 %v1405, %v1405
      %v1414 = vpack.c.b16 %v1412, %v1412
      %v1481 = vunpack.c.l.b16 %v1274
      %v1482 = vunpack.c.h.b16 %v1274
      %v1483 = vunpack.c.l.b16 %v1275
      %v1484 = vunpack.c.h.b16 %v1275
      %v1485 = vunpack.c.l.b16 %v1276
      %v1486 = vunpack.c.h.b16 %v1276
      %v1487 = vunpack.c.l.b16 %v1277
      %v1488 = vunpack.c.h.b16 %v1277
      %v1489 = vunpack.c.l.b16 %v1278
      %v1490 = vunpack.c.h.b16 %v1278
      %v1491 = vunpack.c.l.b16 %v1279
      %v1492 = vunpack.c.h.b16 %v1279
      %v1493 = vunpack.c.l.b16 %v1280
      %v1494 = vunpack.c.h.b16 %v1280
      %v1495 = vunpack.c.l.b16 %v1281
      %v1496 = vunpack.c.h.b16 %v1281
      %v1497 = vunpack.c.l.b16 %v1282
      %v1498 = vunpack.c.h.b16 %v1282
      %v1499 = vunpack.c.l.b16 %v1283
      %v1500 = vunpack.c.h.b16 %v1283
      %v1501 = vunpack.c.l.b16 %v1284
      %v1502 = vunpack.c.h.b16 %v1284
      %v1503 = vunpack.c.l.b16 %v1285
      %v1504 = vunpack.c.h.b16 %v1285
      %v1505 = vunpack.c.l.b16 %v1286
      %v1506 = vunpack.c.h.b16 %v1286
      %v1507 = vunpack.c.l.b16 %v1287
      %v1508 = vunpack.c.h.b16 %v1287
      %v1509 = vunpack.c.l.b16 %v1288
      %v1510 = vunpack.c.h.b16 %v1288
      %v1511 = vunpack.c.l.b16 %v1289
      %v1512 = vunpack.c.h.b16 %v1289
      %v1513 = vunpack.c.l.b16 %v1290
      %v1514 = vunpack.c.h.b16 %v1290
      %v1515 = vunpack.c.l.b16 %v1291
      %v1516 = vunpack.c.h.b16 %v1291
      %v1517 = vunpack.c.l.b16 %v1292
      %v1518 = vunpack.c.h.b16 %v1292
      %v1519 = vunpack.c.l.b16 %v1293
      %v1520 = vunpack.c.h.b16 %v1293
      %v1521 = vunpack.c.l.b16 %v1294
      %v1522 = vunpack.c.h.b16 %v1294
      %v1523 = vunpack.c.l.b16 %v1295
      %v1524 = vunpack.c.h.b16 %v1295
      %v1525 = vunpack.c.l.b16 %v1296
      %v1526 = vunpack.c.h.b16 %v1296
      %v1527 = vunpack.c.l.b16 %v1297
      %v1528 = vunpack.c.h.b16 %v1297
      %v1529 = vunpack.c.l.b16 %v1298
      %v1530 = vunpack.c.h.b16 %v1298
      %v1531 = vunpack.c.l.b16 %v1299
      %v1532 = vunpack.c.h.b16 %v1299
      %v1533 = vunpack.c.l.b16 %v1300
      %v1534 = vunpack.c.h.b16 %v1300
      %v1535 = vunpack.c.l.b16 %v1301
      %v1536 = vunpack.c.h.b16 %v1301
      %v1537 = vunpack.c.l.b16 %v1302
      %v1538 = vunpack.c.h.b16 %v1302
      %v1539 = vunpack.c.l.b16 %v1303
      %v1540 = vunpack.c.h.b16 %v1303
      %v1541 = vunpack.c.l.b16 %v1304
      %v1542 = vunpack.c.h.b16 %v1304
      %v1543 = vunpack.c.l.b16 %v1305
      %v1544 = vunpack.c.h.b16 %v1305
      %v1545 = vunpack.c.l.b16 %v1306
      %v1546 = vunpack.c.h.b16 %v1306
      %v1547 = vunpack.c.l.b16 %v1307
      %v1548 = vunpack.c.h.b16 %v1307
      %v1549 = vunpack.c.l.b16 %v1308
      %v1550 = vunpack.c.h.b16 %v1308
      %v1551 = vunpack.c.l.b16 %v1309
      %v1552 = vunpack.c.h.b16 %v1309
      %v1553 = vunpack.c.l.b16 %v1310
      %v1554 = vunpack.c.h.b16 %v1310
      %v1555 = vunpack.c.l.b16 %v1311
      %v1556 = vunpack.c.h.b16 %v1311
      %v1557 = vunpack.c.l.b16 %v1312
      %v1558 = vunpack.c.h.b16 %v1312
      %v1559 = vunpack.c.l.b16 %v1313
      %v1560 = vunpack.c.h.b16 %v1313
      %v1561 = vunpack.c.l.b16 %v1314
      %v1562 = vunpack.c.h.b16 %v1314
      %v1563 = vunpack.c.l.b16 %v1315
      %v1564 = vunpack.c.h.b16 %v1315
      %v1565 = vunpack.c.l.b16 %v1316
      %v1566 = vunpack.c.h.b16 %v1316
      %v1567 = vunpack.c.l.b16 %v1317
      %v1568 = vunpack.c.h.b16 %v1317
      %v1569 = vunpack.c.l.b16 %v1318
      %v1570 = vunpack.c.h.b16 %v1318
      %v1571 = vunpack.c.l.b16 %v1319
      %v1572 = vunpack.c.h.b16 %v1319
      %v1573 = vunpack.c.l.b16 %v1320
      %v1574 = vunpack.c.h.b16 %v1320
      %v1575 = vunpack.c.l.b16 %v1321
      %v1576 = vunpack.c.h.b16 %v1321
      %v1577 = vunpack.c.l.b16 %v1322
      %v1578 = vunpack.c.h.b16 %v1322
      %v1579 = vunpack.c.l.b16 %v1323
      %v1580 = vunpack.c.h.b16 %v1323
      %v1581 = vunpack.c.l.b16 %v1324
      %v1582 = vunpack.c.h.b16 %v1324
      %v1583 = vunpack.c.l.b16 %v1325
      %v1584 = vunpack.c.h.b16 %v1325
      %v1585 = vunpack.c.l.b16 %v1326
      %v1586 = vunpack.c.h.b16 %v1326
      %v1587 = vunpack.c.l.b16 %v1327
      %v1588 = vunpack.c.h.b16 %v1327
      %v1589 = vunpack.c.l.b16 %v1328
      %v1590 = vunpack.c.h.b16 %v1328
      %v1591 = vunpack.c.l.b16 %v1329
      %v1592 = vunpack.c.h.b16 %v1329
      %v1593 = vunpack.c.l.b16 %v1330
      %v1594 = vunpack.c.h.b16 %v1330
      %v1595 = vunpack.c.l.b16 %v1331
      %v1596 = vunpack.c.h.b16 %v1331
      %v1597 = vunpack.c.l.b16 %v1332
      %v1598 = vunpack.c.h.b16 %v1332
      %v1599 = vunpack.c.l.b16 %v1333
      %v1600 = vunpack.c.h.b16 %v1333
      %v1601 = vunpack.c.l.b16 %v1334
      %v1602 = vunpack.c.h.b16 %v1334
      %v1603 = vunpack.c.l.b16 %v1335
      %v1604 = vunpack.c.h.b16 %v1335
      %v1605 = vunpack.c.l.b16 %v1336
      %v1606 = vunpack.c.h.b16 %v1336
      %v1607 = vunpack.c.l.b16 %v1337
      %v1608 = vunpack.c.h.b16 %v1337
      %v1609 = vpack.c.b16 %v1485, %v1481
      %v1610 = vpack.c.b16 %v1486, %v1482
      %v1611 = vpack.c.b16 %v1487, %v1483
      %v1612 = vpack.c.b16 %v1488, %v1484
      %v1613 = vpack.c.b16 %v1493, %v1489
      %v1614 = vpack.c.b16 %v1494, %v1490
      %v1615 = vpack.c.b16 %v1495, %v1491
      %v1616 = vpack.c.b16 %v1496, %v1492
      %v1617 = vpack.c.b16 %v1501, %v1497
      %v1618 = vpack.c.b16 %v1502, %v1498
      %v1619 = vpack.c.b16 %v1503, %v1499
      %v1620 = vpack.c.b16 %v1504, %v1500
      %v1621 = vpack.c.b16 %v1509, %v1505
      %v1622 = vpack.c.b16 %v1510, %v1506
      %v1623 = vpack.c.b16 %v1511, %v1507
      %v1624 = vpack.c.b16 %v1512, %v1508
      %v1625 = vpack.c.b16 %v1517, %v1513
      %v1626 = vpack.c.b16 %v1518, %v1514
      %v1627 = vpack.c.b16 %v1519, %v1515
      %v1628 = vpack.c.b16 %v1520, %v1516
      %v1629 = vpack.c.b16 %v1525, %v1521
      %v1630 = vpack.c.b16 %v1526, %v1522
      %v1631 = vpack.c.b16 %v1527, %v1523
      %v1632 = vpack.c.b16 %v1528, %v1524
      %v1633 = vpack.c.b16 %v1533, %v1529
      %v1634 = vpack.c.b16 %v1534, %v1530
      %v1635 = vpack.c.b16 %v1535, %v1531
      %v1636 = vpack.c.b16 %v1536, %v1532
      %v1637 = vpack.c.b16 %v1541, %v1537
      %v1638 = vpack.c.b16 %v1542, %v1538
      %v1639 = vpack.c.b16 %v1543, %v1539
      %v1640 = vpack.c.b16 %v1544, %v1540
      %v1641 = vpack.c.b16 %v1549, %v1545
      %v1642 = vpack.c.b16 %v1550, %v1546
      %v1643 = vpack.c.b16 %v1551, %v1547
      %v1644 = vpack.c.b16 %v1552, %v1548
      %v1645 = vpack.c.b16 %v1557, %v1553
      %v1646 = vpack.c.b16 %v1558, %v1554
      %v1647 = vpack.c.b16 %v1559, %v1555
      %v1648 = vpack.c.b16 %v1560, %v1556
      %v1649 = vpack.c.b16 %v1565, %v1561
      %v1650 = vpack.c.b16 %v1566, %v1562
      %v1651 = vpack.c.b16 %v1567, %v1563
      %v1652 = vpack.c.b16 %v1568, %v1564
      %v1653 = vpack.c.b16 %v1573, %v1569
      %v1654 = vpack.c.b16 %v1574, %v1570
      %v1655 = vpack.c.b16 %v1575, %v1571
      %v1656 = vpack.c.b16 %v1576, %v1572
      %v1657 = vpack.c.b16 %v1581, %v1577
      %v1658 = vpack.c.b16 %v1582, %v1578
      %v1659 = vpack.c.b16 %v1583, %v1579
      %v1660 = vpack.c.b16 %v1584, %v1580
      %v1661 = vpack.c.b16 %v1589, %v1585
      %v1662 = vpack.c.b16 %v1590, %v1586
      %v1663 = vpack.c.b16 %v1591, %v1587
      %v1664 = vpack.c.b16 %v1592, %v1588
      %v1665 = vpack.c.b16 %v1597, %v1593
      %v1666 = vpack.c.b16 %v1598, %v1594
      %v1667 = vpack.c.b16 %v1599, %v1595
      %v1668 = vpack.c.b16 %v1600, %v1596
      %v1669 = vpack.c.b16 %v1605, %v1601
      %v1670 = vpack.c.b16 %v1606, %v1602
      %v1671 = vpack.c.b16 %v1607, %v1603
      %v1672 = vpack.c.b16 %v1608, %v1604
      %1737 = vmatprep.subr.bf16.mxu0 %v1610
      %1738 = vmatpush1.bf16.msra.mxu0 %v1609
      %1739 = vmatprep.subr.bf16.mxu0 %v1614
      %1740 = vmatpush1.bf16.msra.mxu0 %v1613
      %1741 = vmatprep.subr.bf16.mxu0 %v1618
      %1742 = vmatpush1.bf16.msra.mxu0 %v1617
      %1743 = vmatprep.subr.bf16.mxu0 %v1622
      %1744 = vmatpush1.bf16.msra.mxu0 %v1621
      %1745 = vmatprep.subr.bf16.mxu0 %v1626
      %1746 = vmatpush1.bf16.msra.mxu0 %v1625
      %1747 = vmatprep.subr.bf16.mxu0 %v1630
      %1748 = vmatpush1.bf16.msra.mxu0 %v1629
      %1749 = vmatprep.subr.bf16.mxu0 %v1634
      %1750 = vmatpush1.bf16.msra.mxu0 %v1633
      %1751 = vmatprep.subr.bf16.mxu0 %v1638
      %1752 = vmatpush1.bf16.msra.mxu0 %v1637
      %1753 = vmatprep.subr.bf16.mxu0 %v1642
      %1754 = vmatpush1.bf16.msra.mxu0 %v1641
      %1755 = vmatprep.subr.bf16.mxu0 %v1646
      %1756 = vmatpush1.bf16.msra.mxu0 %v1645
      %1757 = vmatprep.subr.bf16.mxu0 %v1650
      %1758 = vmatpush1.bf16.msra.mxu0 %v1649
      %1759 = vmatprep.subr.bf16.mxu0 %v1654
      %1760 = vmatpush1.bf16.msra.mxu0 %v1653
      %1761 = vmatprep.subr.bf16.mxu0 %v1658
      %1762 = vmatpush1.bf16.msra.mxu0 %v1657
      %1763 = vmatprep.subr.bf16.mxu0 %v1662
      %1764 = vmatpush1.bf16.msra.mxu0 %v1661
      %1765 = vmatprep.subr.bf16.mxu0 %v1666
      %1766 = vmatpush1.bf16.msra.mxu0 %v1665
      %1767 = vmatprep.subr.bf16.mxu0 %v1670
      %1768 = vmatpush1.bf16.msra.mxu0 %v1669
      %1769 = vmatprep.mubr.bf16.mxu0 %v1414
      %1770 = vmatmul.mubr.bf16.gmra.mrb[0].mxu0 %v1413
      %v1771 = vpop.f32.mrb[0].mxu0
      %v1772 = vadd.f32 %v1343, %v1771
      %v1773 = vpop.f32.mrb[0].mxu0
      %v1774 = vadd.f32 %v1347, %v1773
      %v1775 = vpop.f32.mrb[0].mxu0
      %v1776 = vpop.f32.mrb[0].mxu0
      %1777 = vdwg.mxu0
      %1778 = vmatprep.subr.bf16.mxu0 %v1612
      %1779 = vmatpush1.bf16.msra.mxu0 %v1611
      %1780 = vmatprep.subr.bf16.mxu0 %v1616
      %1781 = vmatpush1.bf16.msra.mxu0 %v1615
      %1782 = vmatprep.subr.bf16.mxu0 %v1620
      %1783 = vmatpush1.bf16.msra.mxu0 %v1619
      %1784 = vmatprep.subr.bf16.mxu0 %v1624
      %1785 = vmatpush1.bf16.msra.mxu0 %v1623
      %1786 = vmatprep.subr.bf16.mxu0 %v1628
      %1787 = vmatpush1.bf16.msra.mxu0 %v1627
      %1788 = vmatprep.subr.bf16.mxu0 %v1632
      %1789 = vmatpush1.bf16.msra.mxu0 %v1631
      %1790 = vmatprep.subr.bf16.mxu0 %v1636
      %1791 = vmatpush1.bf16.msra.mxu0 %v1635
      %1792 = vmatprep.subr.bf16.mxu0 %v1640
      %1793 = vmatpush1.bf16.msra.mxu0 %v1639
      %1794 = vmatprep.subr.bf16.mxu0 %v1644
      %1795 = vmatpush1.bf16.msra.mxu0 %v1643
      %1796 = vmatprep.subr.bf16.mxu0 %v1648
      %1797 = vmatpush1.bf16.msra.mxu0 %v1647
      %1798 = vmatprep.subr.bf16.mxu0 %v1652
      %1799 = vmatpush1.bf16.msra.mxu0 %v1651
      %1800 = vmatprep.subr.bf16.mxu0 %v1656
      %1801 = vmatpush1.bf16.msra.mxu0 %v1655
      %1802 = vmatprep.subr.bf16.mxu0 %v1660
      %1803 = vmatpush1.bf16.msra.mxu0 %v1659
      %1804 = vmatprep.subr.bf16.mxu0 %v1664
      %1805 = vmatpush1.bf16.msra.mxu0 %v1663
      %1806 = vmatprep.subr.bf16.mxu0 %v1668
      %1807 = vmatpush1.bf16.msra.mxu0 %v1667
      %1808 = vmatprep.subr.bf16.mxu0 %v1672
      %1809 = vmatpush1.bf16.msra.mxu0 %v1671
      %1810 = vmatprep.mubr.bf16.mxu0 %v1414
      %1811 = vmatmul.mubr.bf16.gmra.mrb[0].mxu0 %v1413
      %v1812 = vpop.f32.mrb[0].mxu0
      %v1813 = vadd.f32 %v1351, %v1812
      %v1814 = vpop.f32.mrb[0].mxu0
      %v1815 = vadd.f32 %v1355, %v1814
      %v1816 = vpop.f32.mrb[0].mxu0
      %v1817 = vpop.f32.mrb[0].mxu0
      %1818 = vdwg.mxu0
      %v1823 = vcombine.low %v1772, %v1774
      %v1824 = vcombine.high %v1772, %v1774
      %v1825 = vcombine.low %v1813, %v1815
      %v1826 = vcombine.high %v1813, %v1815
      %v1828 = vunpack.c.l.s4 1966171168
      %v1829 = vunpack.c.0.s8 %v1828
      %v1830 = vlaneseq
      %v1831 = vshrl.u32 %v1830, 7
      %v1832 = vsub.s32 %v1829, %v1831
      %v1833 = vrot.slane %v1823, %v1832
      %v1835 = vunpack.c.l.s4 1966171168
      %v1836 = vunpack.c.0.s8 %v1835
      %v1837 = vlaneseq
      %v1838 = vshrl.u32 %v1837, 7
      %v1839 = vsub.s32 %v1836, %v1838
      %v1840 = vrot.slane %v1824, %v1839
      %v1842 = vunpack.c.l.s4 1966171168
      %v1843 = vunpack.c.0.s8 %v1842
      %v1844 = vlaneseq
      %v1845 = vshrl.u32 %v1844, 7
      %v1846 = vsub.s32 %v1843, %v1845
      %v1847 = vrot.slane %v1825, %v1846
      %v1849 = vunpack.c.l.s4 1966171168
      %v1850 = vunpack.c.0.s8 %v1849
      %v1851 = vlaneseq
      %v1852 = vshrl.u32 %v1851, 7
      %v1853 = vsub.s32 %v1850, %v1852
      %v1854 = vrot.slane %v1826, %v1853
      %v1855 = vcombine.low %v1833, %v1847
      %v1856 = vcombine.high %v1833, %v1847
      %v1857 = vcombine.low %v1840, %v1854
      %v1858 = vcombine.high %v1840, %v1854
      %v1860 = vunpack.c.l.s4 1966171168
      %v1861 = vunpack.c.0.s8 %v1860
      %v1862 = vlaneseq
      %v1863 = vshrl.u32 %v1862, 7
      %v1864 = vsub.s32 %v1861, %v1863
      %v1865 = vrot.slane %v1855, %v1864
      %v1867 = vunpack.c.l.s4 1966171168
      %v1868 = vunpack.c.0.s8 %v1867
      %v1869 = vlaneseq
      %v1870 = vshrl.u32 %v1869, 7
      %v1871 = vsub.s32 %v1868, %v1870
      %v1872 = vrot.slane %v1857, %v1871
      %v1874 = vunpack.c.l.s4 1966171168
      %v1875 = vunpack.c.0.s8 %v1874
      %v1876 = vlaneseq
      %v1877 = vshrl.u32 %v1876, 7
      %v1878 = vsub.s32 %v1875, %v1877
      %v1879 = vrot.slane %v1856, %v1878
      %v1881 = vunpack.c.l.s4 1966171168
      %v1882 = vunpack.c.0.s8 %v1881
      %v1883 = vlaneseq
      %v1884 = vshrl.u32 %v1883, 7
      %v1885 = vsub.s32 %v1882, %v1884
      %v1886 = vrot.slane %v1858, %v1885
      %v1887 = vcombine.high %v1865, %v1865
      %v1888 = vcombine.high %v1872, %v1872
      %v1889 = vcombine.high %v1879, %v1879
      %v1890 = vcombine.high %v1886, %v1886
      %v1891 = vlaneseq
      %v1892 = vshrl.u32 %v1891, 7
      %v1893 = vsub.s32 0, %v1892
      %v1894 = vrot.slane %v1865, %v1893
      %v1895 = vlaneseq
      %v1896 = vshrl.u32 %v1895, 7
      %v1897 = vsub.s32 1, %v1896
      %v1898 = vrot.slane %v1865, %v1897
      %v1899 = vlaneseq
      %v1900 = vshrl.u32 %v1899, 7
      %v1901 = vsub.s32 2, %v1900
      %v1902 = vrot.slane %v1865, %v1901
      %v1903 = vlaneseq
      %v1904 = vshrl.u32 %v1903, 7
      %v1905 = vsub.s32 3, %v1904
      %v1906 = vrot.slane %v1865, %v1905
      %v1907 = vlaneseq
      %v1908 = vshrl.u32 %v1907, 7
      %v1909 = vsub.s32 0, %v1908
      %v1910 = vrot.slane %v1879, %v1909
      %v1911 = vlaneseq
      %v1912 = vshrl.u32 %v1911, 7
      %v1913 = vsub.s32 1, %v1912
      %v1914 = vrot.slane %v1879, %v1913
      %v1915 = vlaneseq
      %v1916 = vshrl.u32 %v1915, 7
      %v1917 = vsub.s32 2, %v1916
      %v1918 = vrot.slane %v1879, %v1917
      %v1919 = vlaneseq
      %v1920 = vshrl.u32 %v1919, 7
      %v1921 = vsub.s32 3, %v1920
      %v1922 = vrot.slane %v1879, %v1921
      %v1923 = vlaneseq
      %v1924 = vshrl.u32 %v1923, 7
      %v1925 = vsub.s32 0, %v1924
      %v1926 = vrot.slane %v1887, %v1925
      %v1927 = vlaneseq
      %v1928 = vshrl.u32 %v1927, 7
      %v1929 = vsub.s32 1, %v1928
      %v1930 = vrot.slane %v1887, %v1929
      %v1931 = vlaneseq
      %v1932 = vshrl.u32 %v1931, 7
      %v1933 = vsub.s32 2, %v1932
      %v1934 = vrot.slane %v1887, %v1933
      %v1935 = vlaneseq
      %v1936 = vshrl.u32 %v1935, 7
      %v1937 = vsub.s32 3, %v1936
      %v1938 = vrot.slane %v1887, %v1937
      %v1939 = vlaneseq
      %v1940 = vshrl.u32 %v1939, 7
      %v1941 = vsub.s32 0, %v1940
      %v1942 = vrot.slane %v1889, %v1941
      %v1943 = vlaneseq
      %v1944 = vshrl.u32 %v1943, 7
      %v1945 = vsub.s32 1, %v1944
      %v1946 = vrot.slane %v1889, %v1945
      %v1947 = vlaneseq
      %v1948 = vshrl.u32 %v1947, 7
      %v1949 = vsub.s32 2, %v1948
      %v1950 = vrot.slane %v1889, %v1949
      %v1951 = vlaneseq
      %v1952 = vshrl.u32 %v1951, 7
      %v1953 = vsub.s32 3, %v1952
      %v1954 = vrot.slane %v1889, %v1953
      %v1955 = vlaneseq
      %v1956 = vshrl.u32 %v1955, 7
      %v1957 = vsub.s32 0, %v1956
      %v1958 = vrot.slane %v1872, %v1957
      %v1959 = vlaneseq
      %v1960 = vshrl.u32 %v1959, 7
      %v1961 = vsub.s32 1, %v1960
      %v1962 = vrot.slane %v1872, %v1961
      %v1963 = vlaneseq
      %v1964 = vshrl.u32 %v1963, 7
      %v1965 = vsub.s32 2, %v1964
      %v1966 = vrot.slane %v1872, %v1965
      %v1967 = vlaneseq
      %v1968 = vshrl.u32 %v1967, 7
      %v1969 = vsub.s32 3, %v1968
      %v1970 = vrot.slane %v1872, %v1969
      %v1971 = vlaneseq
      %v1972 = vshrl.u32 %v1971, 7
      %v1973 = vsub.s32 0, %v1972
      %v1974 = vrot.slane %v1886, %v1973
      %v1975 = vlaneseq
      %v1976 = vshrl.u32 %v1975, 7
      %v1977 = vsub.s32 1, %v1976
      %v1978 = vrot.slane %v1886, %v1977
      %v1979 = vlaneseq
      %v1980 = vshrl.u32 %v1979, 7
      %v1981 = vsub.s32 2, %v1980
      %v1982 = vrot.slane %v1886, %v1981
      %v1983 = vlaneseq
      %v1984 = vshrl.u32 %v1983, 7
      %v1985 = vsub.s32 3, %v1984
      %v1986 = vrot.slane %v1886, %v1985
      %v1987 = vlaneseq
      %v1988 = vshrl.u32 %v1987, 7
      %v1989 = vsub.s32 0, %v1988
      %v1990 = vrot.slane %v1888, %v1989
      %v1991 = vlaneseq
      %v1992 = vshrl.u32 %v1991, 7
      %v1993 = vsub.s32 1, %v1992
      %v1994 = vrot.slane %v1888, %v1993
      %v1995 = vlaneseq
      %v1996 = vshrl.u32 %v1995, 7
      %v1997 = vsub.s32 2, %v1996
      %v1998 = vrot.slane %v1888, %v1997
      %v1999 = vlaneseq
      %v2000 = vshrl.u32 %v1999, 7
      %v2001 = vsub.s32 3, %v2000
      %v2002 = vrot.slane %v1888, %v2001
      %v2003 = vlaneseq
      %v2004 = vshrl.u32 %v2003, 7
      %v2005 = vsub.s32 0, %v2004
      %v2006 = vrot.slane %v1890, %v2005
      %v2007 = vlaneseq
      %v2008 = vshrl.u32 %v2007, 7
      %v2009 = vsub.s32 1, %v2008
      %v2010 = vrot.slane %v1890, %v2009
      %v2011 = vlaneseq
      %v2012 = vshrl.u32 %v2011, 7
      %v2013 = vsub.s32 2, %v2012
      %v2014 = vrot.slane %v1890, %v2013
      %v2015 = vlaneseq
      %v2016 = vshrl.u32 %v2015, 7
      %v2017 = vsub.s32 3, %v2016
      %v2018 = vrot.slane %v1890, %v2017
      %v2051 = vadd.f32 %v1067, %v1894
      %v2052 = vadd.f32 %v1069, %v1898
      %v2053 = vadd.f32 %v1180, %v1902
      %v2054 = vadd.f32 %v1182, %v1906
      %v2055 = vadd.f32 %v1071, %v1894
      %v2056 = vadd.f32 %v1073, %v1898
      %v2057 = vadd.f32 %v1184, %v1902
      %v2058 = vadd.f32 %v1186, %v1906
      %v2059 = vadd.f32 %v1077, %v1910
      %v2060 = vadd.f32 %v1079, %v1914
      %v2061 = vadd.f32 %v1190, %v1918
      %v2062 = vadd.f32 %v1192, %v1922
      %v2063 = vadd.f32 %v1081, %v1910
      %v2064 = vadd.f32 %v1083, %v1914
      %v2065 = vadd.f32 %v1194, %v1918
      %v2066 = vadd.f32 %v1196, %v1922
      %v2067 = vadd.f32 %v1087, %v1926
      %v2068 = vadd.f32 %v1089, %v1930
      %v2069 = vadd.f32 %v1200, %v1934
      %v2070 = vadd.f32 %v1202, %v1938
      %v2071 = vadd.f32 %v1091, %v1926
      %v2072 = vadd.f32 %v1093, %v1930
      %v2073 = vadd.f32 %v1204, %v1934
      %v2074 = vadd.f32 %v1206, %v1938
      %v2075 = vadd.f32 %v1097, %v1942
      %v2076 = vadd.f32 %v1099, %v1946
      %v2077 = vadd.f32 %v1210, %v1950
      %v2078 = vadd.f32 %v1212, %v1954
      %v2079 = vadd.f32 %v1101, %v1942
      %v2080 = vadd.f32 %v1103, %v1946
      %v2081 = vadd.f32 %v1214, %v1950
      %v2082 = vadd.f32 %v1216, %v1954
      %v2083 = vadd.f32 %v1107, %v1958
      %v2084 = vadd.f32 %v1109, %v1962
      %v2085 = vadd.f32 %v1220, %v1966
      %v2086 = vadd.f32 %v1222, %v1970
      %v2087 = vadd.f32 %v1111, %v1958
      %v2088 = vadd.f32 %v1113, %v1962
      %v2089 = vadd.f32 %v1224, %v1966
      %v2090 = vadd.f32 %v1226, %v1970
      %v2091 = vadd.f32 %v1117, %v1974
      %v2092 = vadd.f32 %v1119, %v1978
      %v2093 = vadd.f32 %v1230, %v1982
      %v2094 = vadd.f32 %v1232, %v1986
      %v2095 = vadd.f32 %v1121, %v1974
      %v2096 = vadd.f32 %v1123, %v1978
      %v2097 = vadd.f32 %v1234, %v1982
      %v2098 = vadd.f32 %v1236, %v1986
      %v2099 = vadd.f32 %v1127, %v1990
      %v2100 = vadd.f32 %v1129, %v1994
      %v2101 = vadd.f32 %v1240, %v1998
      %v2102 = vadd.f32 %v1242, %v2002
      %v2103 = vadd.f32 %v1131, %v1990
      %v2104 = vadd.f32 %v1133, %v1994
      %v2105 = vadd.f32 %v1244, %v1998
      %v2106 = vadd.f32 %v1246, %v2002
      %v2107 = vadd.f32 %v1137, %v2006
      %v2108 = vadd.f32 %v1139, %v2010
      %v2109 = vadd.f32 %v1250, %v2014
      %v2110 = vadd.f32 %v1252, %v2018
      %v2111 = vadd.f32 %v1141, %v2006
      %v2112 = vadd.f32 %v1143, %v2010
      %v2113 = vadd.f32 %v1254, %v2014
      %v2114 = vadd.f32 %v1256, %v2018
      %v2115 = vmax.f32 %v2051, 0.0
      %v2116 = vmax.f32 %v2052, 0.0
      %v2117 = vmax.f32 %v2053, 0.0
      %v2118 = vmax.f32 %v2054, 0.0
      %v2119 = vmax.f32 %v2055, 0.0
      %v2120 = vmax.f32 %v2056, 0.0
      %v2121 = vmax.f32 %v2057, 0.0
      %v2122 = vmax.f32 %v2058, 0.0
      %v2123 = vmax.f32 %v2059, 0.0
      %v2124 = vmax.f32 %v2060, 0.0
      %v2125 = vmax.f32 %v2061, 0.0
      %v2126 = vmax.f32 %v2062, 0.0
      %v2127 = vmax.f32 %v2063, 0.0
      %v2128 = vmax.f32 %v2064, 0.0
      %v2129 = vmax.f32 %v2065, 0.0
      %v2130 = vmax.f32 %v2066, 0.0
      %v2131 = vmax.f32 %v2067, 0.0
      %v2132 = vmax.f32 %v2068, 0.0
      %v2133 = vmax.f32 %v2069, 0.0
      %v2134 = vmax.f32 %v2070, 0.0
      %v2135 = vmax.f32 %v2071, 0.0
      %v2136 = vmax.f32 %v2072, 0.0
      %v2137 = vmax.f32 %v2073, 0.0
      %v2138 = vmax.f32 %v2074, 0.0
      %v2139 = vmax.f32 %v2075, 0.0
      %v2140 = vmax.f32 %v2076, 0.0
      %v2141 = vmax.f32 %v2077, 0.0
      %v2142 = vmax.f32 %v2078, 0.0
      %v2143 = vmax.f32 %v2079, 0.0
      %v2144 = vmax.f32 %v2080, 0.0
      %v2145 = vmax.f32 %v2081, 0.0
      %v2146 = vmax.f32 %v2082, 0.0
      %v2147 = vmax.f32 %v2083, 0.0
      %v2148 = vmax.f32 %v2084, 0.0
      %v2149 = vmax.f32 %v2085, 0.0
      %v2150 = vmax.f32 %v2086, 0.0
      %v2151 = vmax.f32 %v2087, 0.0
      %v2152 = vmax.f32 %v2088, 0.0
      %v2153 = vmax.f32 %v2089, 0.0
      %v2154 = vmax.f32 %v2090, 0.0
      %v2155 = vmax.f32 %v2091, 0.0
      %v2156 = vmax.f32 %v2092, 0.0
      %v2157 = vmax.f32 %v2093, 0.0
      %v2158 = vmax.f32 %v2094, 0.0
      %v2159 = vmax.f32 %v2095, 0.0
      %v2160 = vmax.f32 %v2096, 0.0
      %v2161 = vmax.f32 %v2097, 0.0
      %v2162 = vmax.f32 %v2098, 0.0
      %v2163 = vmax.f32 %v2099, 0.0
      %v2164 = vmax.f32 %v2100, 0.0
      %v2165 = vmax.f32 %v2101, 0.0
      %v2166 = vmax.f32 %v2102, 0.0
      %v2167 = vmax.f32 %v2103, 0.0
      %v2168 = vmax.f32 %v2104, 0.0
      %v2169 = vmax.f32 %v2105, 0.0
      %v2170 = vmax.f32 %v2106, 0.0
      %v2171 = vmax.f32 %v2107, 0.0
      %v2172 = vmax.f32 %v2108, 0.0
      %v2173 = vmax.f32 %v2109, 0.0
      %v2174 = vmax.f32 %v2110, 0.0
      %v2175 = vmax.f32 %v2111, 0.0
      %v2176 = vmax.f32 %v2112, 0.0
      %v2177 = vmax.f32 %v2113, 0.0
      %v2178 = vmax.f32 %v2114, 0.0
      %v2179 = vpack.c.bf16 %v2119, %v2115
      %v2180 = vpack.c.bf16 %v2120, %v2116
      %v2181 = vpack.c.bf16 %v2121, %v2117
      %v2182 = vpack.c.bf16 %v2122, %v2118
      %v2183 = vpack.c.bf16 %v2127, %v2123
      %v2184 = vpack.c.bf16 %v2128, %v2124
      %v2185 = vpack.c.bf16 %v2129, %v2125
      %v2186 = vpack.c.bf16 %v2130, %v2126
      %v2187 = vpack.c.bf16 %v2135, %v2131
      %v2188 = vpack.c.bf16 %v2136, %v2132
      %v2189 = vpack.c.bf16 %v2137, %v2133
      %v2190 = vpack.c.bf16 %v2138, %v2134
      %v2191 = vpack.c.bf16 %v2143, %v2139
      %v2192 = vpack.c.bf16 %v2144, %v2140
      %v2193 = vpack.c.bf16 %v2145, %v2141
      %v2194 = vpack.c.bf16 %v2146, %v2142
      %v2195 = vpack.c.bf16 %v2151, %v2147
      %v2196 = vpack.c.bf16 %v2152, %v2148
      %v2197 = vpack.c.bf16 %v2153, %v2149
      %v2198 = vpack.c.bf16 %v2154, %v2150
      %v2199 = vpack.c.bf16 %v2159, %v2155
      %v2200 = vpack.c.bf16 %v2160, %v2156
      %v2201 = vpack.c.bf16 %v2161, %v2157
      %v2202 = vpack.c.bf16 %v2162, %v2158
      %v2203 = vpack.c.bf16 %v2167, %v2163
      %v2204 = vpack.c.bf16 %v2168, %v2164
      %v2205 = vpack.c.bf16 %v2169, %v2165
      %v2206 = vpack.c.bf16 %v2170, %v2166
      %v2207 = vpack.c.bf16 %v2175, %v2171
      %v2208 = vpack.c.bf16 %v2176, %v2172
      %v2209 = vpack.c.bf16 %v2177, %v2173
      %v2210 = vpack.c.bf16 %v2178, %v2174
      %v2211 = vld [vmem:[%s7] sm:$0xf]
      %v2212 = vld [vmem:[%s7 + $0x4] sm:$0xf]
      %v2213 = vld [vmem:[%s7 + $0x8] sm:$0xf]
      %v2214 = vld [vmem:[%s7 + $0xc] sm:$0xf]
      %v2215 = vld [vmem:[%s7 + $0x10] sm:$0xf]
      %v2216 = vld [vmem:[%s7 + $0x14] sm:$0xf]
      %v2217 = vld [vmem:[%s7 + $0x18] sm:$0xf]
      %v2218 = vld [vmem:[%s7 + $0x1c] sm:$0xf]
      %v2219 = vld [vmem:[%s7 + $0x20] sm:$0xf]
      %v2220 = vld [vmem:[%s7 + $0x24] sm:$0xf]
      %v2221 = vld [vmem:[%s7 + $0x28] sm:$0xf]
      %v2222 = vld [vmem:[%s7 + $0x2c] sm:$0xf]
      %v2223 = vld [vmem:[%s7 + $0x30] sm:$0xf]
      %v2224 = vld [vmem:[%s7 + $0x34] sm:$0xf]
      %v2225 = vld [vmem:[%s7 + $0x38] sm:$0xf]
      %v2226 = vld [vmem:[%s7 + $0x3c] sm:$0xf]
      %v2227 = vld [vmem:[%s7 + $0x40] sm:$0xf]
      %v2228 = vld [vmem:[%s7 + $0x44] sm:$0xf]
      %v2229 = vld [vmem:[%s7 + $0x48] sm:$0xf]
      %v2230 = vld [vmem:[%s7 + $0x4c] sm:$0xf]
      %v2231 = vld [vmem:[%s7 + $0x50] sm:$0xf]
      %v2232 = vld [vmem:[%s7 + $0x54] sm:$0xf]
      %v2233 = vld [vmem:[%s7 + $0x58] sm:$0xf]
      %v2234 = vld [vmem:[%s7 + $0x5c] sm:$0xf]
      %v2235 = vld [vmem:[%s7 + $0x60] sm:$0xf]
      %v2236 = vld [vmem:[%s7 + $0x64] sm:$0xf]
      %v2237 = vld [vmem:[%s7 + $0x68] sm:$0xf]
      %v2238 = vld [vmem:[%s7 + $0x6c] sm:$0xf]
      %v2239 = vld [vmem:[%s7 + $0x70] sm:$0xf]
      %v2240 = vld [vmem:[%s7 + $0x74] sm:$0xf]
      %v2241 = vld [vmem:[%s7 + $0x78] sm:$0xf]
      %v2242 = vld [vmem:[%s7 + $0x7c] sm:$0xf]
      %v2243 = vld [vmem:[%s7 + $0x80] sm:$0xf]
      %v2244 = vld [vmem:[%s7 + $0x84] sm:$0xf]
      %v2245 = vld [vmem:[%s7 + $0x88] sm:$0xf]
      %v2246 = vld [vmem:[%s7 + $0x8c] sm:$0xf]
      %v2247 = vld [vmem:[%s7 + $0x90] sm:$0xf]
      %v2248 = vld [vmem:[%s7 + $0x94] sm:$0xf]
      %v2249 = vld [vmem:[%s7 + $0x98] sm:$0xf]
      %v2250 = vld [vmem:[%s7 + $0x9c] sm:$0xf]
      %v2251 = vld [vmem:[%s7 + $0xa0] sm:$0xf]
      %v2252 = vld [vmem:[%s7 + $0xa4] sm:$0xf]
      %v2253 = vld [vmem:[%s7 + $0xa8] sm:$0xf]
      %v2254 = vld [vmem:[%s7 + $0xac] sm:$0xf]
      %v2255 = vld [vmem:[%s7 + $0xb0] sm:$0xf]
      %v2256 = vld [vmem:[%s7 + $0xb4] sm:$0xf]
      %v2257 = vld [vmem:[%s7 + $0xb8] sm:$0xf]
      %v2258 = vld [vmem:[%s7 + $0xbc] sm:$0xf]
      %v2259 = vld [vmem:[%s7 + $0xc0] sm:$0xf]
      %v2260 = vld [vmem:[%s7 + $0xc4] sm:$0xf]
      %v2261 = vld [vmem:[%s7 + $0xc8] sm:$0xf]
      %v2262 = vld [vmem:[%s7 + $0xcc] sm:$0xf]
      %v2263 = vld [vmem:[%s7 + $0xd0] sm:$0xf]
      %v2264 = vld [vmem:[%s7 + $0xd4] sm:$0xf]
      %v2265 = vld [vmem:[%s7 + $0xd8] sm:$0xf]
      %v2266 = vld [vmem:[%s7 + $0xdc] sm:$0xf]
      %v2267 = vld [vmem:[%s7 + $0xe0] sm:$0xf]
      %v2268 = vld [vmem:[%s7 + $0xe4] sm:$0xf]
      %v2269 = vld [vmem:[%s7 + $0xe8] sm:$0xf]
      %v2270 = vld [vmem:[%s7 + $0xec] sm:$0xf]
      %v2271 = vld [vmem:[%s7 + $0xf0] sm:$0xf]
      %v2272 = vld [vmem:[%s7 + $0xf4] sm:$0xf]
      %v2273 = vld [vmem:[%s7 + $0xf8] sm:$0xf]
      %v2274 = vld [vmem:[%s7 + $0xfc] sm:$0xf]
      %v2275 = vld [vmem:[%s8] sm:$0x1]
      %v2277 = vlaneseq
      %v2278 = vshrl.u32 %v2277, 7
      %v2279 = vsub.s32 0, %v2278
      %v2280 = vrot.slane %v2275, %v2279
      %v2346 = vunpack.c.l.b16 %v2211
      %v2347 = vunpack.c.l.b16 %v2212
      %v2348 = vunpack.c.l.b16 %v2213
      %v2349 = vunpack.c.l.b16 %v2214
      %v2350 = vunpack.c.l.b16 %v2215
      %v2351 = vunpack.c.l.b16 %v2216
      %v2352 = vunpack.c.l.b16 %v2217
      %v2353 = vunpack.c.l.b16 %v2218
      %v2354 = vunpack.c.l.b16 %v2219
      %v2355 = vunpack.c.l.b16 %v2220
      %v2356 = vunpack.c.l.b16 %v2221
      %v2357 = vunpack.c.l.b16 %v2222
      %v2358 = vunpack.c.l.b16 %v2223
      %v2359 = vunpack.c.l.b16 %v2224
      %v2360 = vunpack.c.l.b16 %v2225
      %v2361 = vunpack.c.l.b16 %v2226
      %v2362 = vunpack.c.l.b16 %v2227
      %v2363 = vunpack.c.l.b16 %v2228
      %v2364 = vunpack.c.l.b16 %v2229
      %v2365 = vunpack.c.l.b16 %v2230
      %v2366 = vunpack.c.l.b16 %v2231
      %v2367 = vunpack.c.l.b16 %v2232
      %v2368 = vunpack.c.l.b16 %v2233
      %v2369 = vunpack.c.l.b16 %v2234
      %v2370 = vunpack.c.l.b16 %v2235
      %v2371 = vunpack.c.l.b16 %v2236
      %v2372 = vunpack.c.l.b16 %v2237
      %v2373 = vunpack.c.l.b16 %v2238
      %v2374 = vunpack.c.l.b16 %v2239
      %v2375 = vunpack.c.l.b16 %v2240
      %v2376 = vunpack.c.l.b16 %v2241
      %v2377 = vunpack.c.l.b16 %v2242
      %v2378 = vunpack.c.l.b16 %v2243
      %v2379 = vunpack.c.l.b16 %v2244
      %v2380 = vunpack.c.l.b16 %v2245
      %v2381 = vunpack.c.l.b16 %v2246
      %v2382 = vunpack.c.l.b16 %v2247
      %v2383 = vunpack.c.l.b16 %v2248
      %v2384 = vunpack.c.l.b16 %v2249
      %v2385 = vunpack.c.l.b16 %v2250
      %v2386 = vunpack.c.l.b16 %v2251
      %v2387 = vunpack.c.l.b16 %v2252
      %v2388 = vunpack.c.l.b16 %v2253
      %v2389 = vunpack.c.l.b16 %v2254
      %v2390 = vunpack.c.l.b16 %v2255
      %v2391 = vunpack.c.l.b16 %v2256
      %v2392 = vunpack.c.l.b16 %v2257
      %v2393 = vunpack.c.l.b16 %v2258
      %v2394 = vunpack.c.l.b16 %v2259
      %v2395 = vunpack.c.l.b16 %v2260
      %v2396 = vunpack.c.l.b16 %v2261
      %v2397 = vunpack.c.l.b16 %v2262
      %v2398 = vunpack.c.l.b16 %v2263
      %v2399 = vunpack.c.l.b16 %v2264
      %v2400 = vunpack.c.l.b16 %v2265
      %v2401 = vunpack.c.l.b16 %v2266
      %v2402 = vunpack.c.l.b16 %v2267
      %v2403 = vunpack.c.l.b16 %v2268
      %v2404 = vunpack.c.l.b16 %v2269
      %v2405 = vunpack.c.l.b16 %v2270
      %v2406 = vunpack.c.l.b16 %v2271
      %v2407 = vunpack.c.l.b16 %v2272
      %v2408 = vunpack.c.l.b16 %v2273
      %v2409 = vunpack.c.l.b16 %v2274
      %v2410 = vpack.c.b16 %v2347, %v2346
      %v2411 = vpack.c.b16 %v2349, %v2348
      %v2412 = vpack.c.b16 %v2351, %v2350
      %v2413 = vpack.c.b16 %v2353, %v2352
      %v2414 = vpack.c.b16 %v2355, %v2354
      %v2415 = vpack.c.b16 %v2357, %v2356
      %v2416 = vpack.c.b16 %v2359, %v2358
      %v2417 = vpack.c.b16 %v2361, %v2360
      %v2418 = vpack.c.b16 %v2363, %v2362
      %v2419 = vpack.c.b16 %v2365, %v2364
      %v2420 = vpack.c.b16 %v2367, %v2366
      %v2421 = vpack.c.b16 %v2369, %v2368
      %v2422 = vpack.c.b16 %v2371, %v2370
      %v2423 = vpack.c.b16 %v2373, %v2372
      %v2424 = vpack.c.b16 %v2375, %v2374
      %v2425 = vpack.c.b16 %v2377, %v2376
      %v2426 = vpack.c.b16 %v2379, %v2378
      %v2427 = vpack.c.b16 %v2381, %v2380
      %v2428 = vpack.c.b16 %v2383, %v2382
      %v2429 = vpack.c.b16 %v2385, %v2384
      %v2430 = vpack.c.b16 %v2387, %v2386
      %v2431 = vpack.c.b16 %v2389, %v2388
      %v2432 = vpack.c.b16 %v2391, %v2390
      %v2433 = vpack.c.b16 %v2393, %v2392
      %v2434 = vpack.c.b16 %v2395, %v2394
      %v2435 = vpack.c.b16 %v2397, %v2396
      %v2436 = vpack.c.b16 %v2399, %v2398
      %v2437 = vpack.c.b16 %v2401, %v2400
      %v2438 = vpack.c.b16 %v2403, %v2402
      %v2439 = vpack.c.b16 %v2405, %v2404
      %v2440 = vpack.c.b16 %v2407, %v2406
      %v2441 = vpack.c.b16 %v2409, %v2408
      %2474 = vmatprep.subr.bf16.mxu0 0
      %2475 = vmatpush1.bf16.msra.mxu0 %v2410
      %2476 = vmatprep.subr.bf16.mxu0 0
      %2477 = vmatpush1.bf16.msra.mxu0 %v2411
      %2478 = vmatprep.subr.bf16.mxu0 0
      %2479 = vmatpush1.bf16.msra.mxu0 %v2412
      %2480 = vmatprep.subr.bf16.mxu0 0
      %2481 = vmatpush1.bf16.msra.mxu0 %v2413
      %2482 = vmatprep.subr.bf16.mxu0 0
      %2483 = vmatpush1.bf16.msra.mxu0 %v2414
      %2484 = vmatprep.subr.bf16.mxu0 0
      %2485 = vmatpush1.bf16.msra.mxu0 %v2415
      %2486 = vmatprep.subr.bf16.mxu0 0
      %2487 = vmatpush1.bf16.msra.mxu0 %v2416
      %2488 = vmatprep.subr.bf16.mxu0 0
      %2489 = vmatpush1.bf16.msra.mxu0 %v2417
      %2490 = vmatprep.subr.bf16.mxu0 0
      %2491 = vmatpush1.bf16.msra.mxu0 %v2418
      %2492 = vmatprep.subr.bf16.mxu0 0
      %2493 = vmatpush1.bf16.msra.mxu0 %v2419
      %2494 = vmatprep.subr.bf16.mxu0 0
      %2495 = vmatpush1.bf16.msra.mxu0 %v2420
      %2496 = vmatprep.subr.bf16.mxu0 0
      %2497 = vmatpush1.bf16.msra.mxu0 %v2421
      %2498 = vmatprep.subr.bf16.mxu0 0
      %2499 = vmatpush1.bf16.msra.mxu0 %v2422
      %2500 = vmatprep.subr.bf16.mxu0 0
      %2501 = vmatpush1.bf16.msra.mxu0 %v2423
      %2502 = vmatprep.subr.bf16.mxu0 0
      %2503 = vmatpush1.bf16.msra.mxu0 %v2424
      %2504 = vmatprep.subr.bf16.mxu0 0
      %2505 = vmatpush1.bf16.msra.mxu0 %v2425
      %2506 = vmatprep.mubr.bf16.mxu0 %v2180
      %2507 = vmatmul.mubr.bf16.gmra.mrb[0].mxu0 %v2179
      %v2508 = vpop.f32.mrb[0].mxu0
      %v2509 = vadd.f32 %v2280, %v2508
      %v2510 = vpop.f32.mrb[0].mxu0
      %v2511 = vpop.f32.mrb[0].mxu0
      %v2512 = vadd.f32 %v2280, %v2511
      %v2513 = vpop.f32.mrb[0].mxu0
      %2514 = vmatprep.mubr.bf16.mxu0 %v2184
      %2515 = vmatmul.mubr.bf16.gmra.mrb[0].mxu0 %v2183
      %v2516 = vpop.f32.mrb[0].mxu0
      %v2517 = vadd.f32 %v2280, %v2516
      %v2518 = vpop.f32.mrb[0].mxu0
      %v2519 = vpop.f32.mrb[0].mxu0
      %v2520 = vadd.f32 %v2280, %v2519
      %v2521 = vpop.f32.mrb[0].mxu0
      %2522 = vmatprep.mubr.bf16.mxu0 %v2188
      %2523 = vmatmul.mubr.bf16.gmra.mrb[0].mxu0 %v2187
      %v2524 = vpop.f32.mrb[0].mxu0
      %v2525 = vadd.f32 %v2280, %v2524
      %v2526 = vpop.f32.mrb[0].mxu0
      %v2527 = vpop.f32.mrb[0].mxu0
      %v2528 = vadd.f32 %v2280, %v2527
      %v2529 = vpop.f32.mrb[0].mxu0
      %2530 = vmatprep.mubr.bf16.mxu0 %v2192
      %2531 = vmatmul.mubr.bf16.gmra.mrb[0].mxu0 %v2191
      %v2532 = vpop.f32.mrb[0].mxu0
      %v2533 = vadd.f32 %v2280, %v2532
      %v2534 = vpop.f32.mrb[0].mxu0
      %v2535 = vpop.f32.mrb[0].mxu0
      %v2536 = vadd.f32 %v2280, %v2535
      %v2537 = vpop.f32.mrb[0].mxu0
      %2538 = vmatprep.mubr.bf16.mxu0 %v2196
      %2539 = vmatmul.mubr.bf16.gmra.mrb[0].mxu0 %v2195
      %v2540 = vpop.f32.mrb[0].mxu0
      %v2541 = vadd.f32 %v2280, %v2540
      %v2542 = vpop.f32.mrb[0].mxu0
      %v2543 = vpop.f32.mrb[0].mxu0
      %v2544 = vadd.f32 %v2280, %v2543
      %v2545 = vpop.f32.mrb[0].mxu0
      %2546 = vmatprep.mubr.bf16.mxu0 %v2200
      %2547 = vmatmul.mubr.bf16.gmra.mrb[0].mxu0 %v2199
      %v2548 = vpop.f32.mrb[0].mxu0
      %v2549 = vadd.f32 %v2280, %v2548
      %v2550 = vpop.f32.mrb[0].mxu0
      %v2551 = vpop.f32.mrb[0].mxu0
      %v2552 = vadd.f32 %v2280, %v2551
      %v2553 = vpop.f32.mrb[0].mxu0
      %2554 = vmatprep.mubr.bf16.mxu0 %v2204
      %2555 = vmatmul.mubr.bf16.gmra.mrb[0].mxu0 %v2203
      %v2556 = vpop.f32.mrb[0].mxu0
      %v2557 = vadd.f32 %v2280, %v2556
      %v2558 = vpop.f32.mrb[0].mxu0
      %v2559 = vpop.f32.mrb[0].mxu0
      %v2560 = vadd.f32 %v2280, %v2559
      %v2561 = vpop.f32.mrb[0].mxu0
      %2562 = vmatprep.mubr.bf16.mxu0 %v2208
      %2563 = vmatmul.mubr.bf16.gmra.mrb[0].mxu0 %v2207
      %v2564 = vpop.f32.mrb[0].mxu0
      %v2565 = vadd.f32 %v2280, %v2564
      %v2566 = vpop.f32.mrb[0].mxu0
      %v2567 = vpop.f32.mrb[0].mxu0
      %v2568 = vadd.f32 %v2280, %v2567
      %v2569 = vpop.f32.mrb[0].mxu0
      %2570 = vdwg.mxu0
      %2571 = vmatprep.subr.bf16.mxu0 0
      %2572 = vmatpush1.bf16.msra.mxu0 %v2426
      %2573 = vmatprep.subr.bf16.mxu0 0
      %2574 = vmatpush1.bf16.msra.mxu0 %v2427
      %2575 = vmatprep.subr.bf16.mxu0 0
      %2576 = vmatpush1.bf16.msra.mxu0 %v2428
      %2577 = vmatprep.subr.bf16.mxu0 0
      %2578 = vmatpush1.bf16.msra.mxu0 %v2429
      %2579 = vmatprep.subr.bf16.mxu0 0
      %2580 = vmatpush1.bf16.msra.mxu0 %v2430
      %2581 = vmatprep.subr.bf16.mxu0 0
      %2582 = vmatpush1.bf16.msra.mxu0 %v2431
      %2583 = vmatprep.subr.bf16.mxu0 0
      %2584 = vmatpush1.bf16.msra.mxu0 %v2432
      %2585 = vmatprep.subr.bf16.mxu0 0
      %2586 = vmatpush1.bf16.msra.mxu0 %v2433
      %2587 = vmatprep.subr.bf16.mxu0 0
      %2588 = vmatpush1.bf16.msra.mxu0 %v2434
      %2589 = vmatprep.subr.bf16.mxu0 0
      %2590 = vmatpush1.bf16.msra.mxu0 %v2435
      %2591 = vmatprep.subr.bf16.mxu0 0
      %2592 = vmatpush1.bf16.msra.mxu0 %v2436
      %2593 = vmatprep.subr.bf16.mxu0 0
      %2594 = vmatpush1.bf16.msra.mxu0 %v2437
      %2595 = vmatprep.subr.bf16.mxu0 0
      %2596 = vmatpush1.bf16.msra.mxu0 %v2438
      %2597 = vmatprep.subr.bf16.mxu0 0
      %2598 = vmatpush1.bf16.msra.mxu0 %v2439
      %2599 = vmatprep.subr.bf16.mxu0 0
      %2600 = vmatpush1.bf16.msra.mxu0 %v2440
      %2601 = vmatprep.subr.bf16.mxu0 0
      %2602 = vmatpush1.bf16.msra.mxu0 %v2441
      %2603 = vmatprep.mubr.bf16.mxu0 %v2182
      %2604 = vmatmul.mubr.bf16.gmra.mrb[0].mxu0 %v2181
      %v2605 = vpop.f32.mrb[0].mxu0
      %v2606 = vadd.f32 %v2509, %v2605
      %v2607 = vpop.f32.mrb[0].mxu0
      %v2608 = vpop.f32.mrb[0].mxu0
      %v2609 = vadd.f32 %v2512, %v2608
      %v2610 = vpop.f32.mrb[0].mxu0
      %2611 = vmatprep.mubr.bf16.mxu0 %v2186
      %2612 = vmatmul.mubr.bf16.gmra.mrb[0].mxu0 %v2185
      %v2613 = vpop.f32.mrb[0].mxu0
      %v2614 = vadd.f32 %v2517, %v2613
      %v2615 = vpop.f32.mrb[0].mxu0
      %v2616 = vpop.f32.mrb[0].mxu0
      %v2617 = vadd.f32 %v2520, %v2616
      %v2618 = vpop.f32.mrb[0].mxu0
      %2619 = vmatprep.mubr.bf16.mxu0 %v2190
      %2620 = vmatmul.mubr.bf16.gmra.mrb[0].mxu0 %v2189
      %v2621 = vpop.f32.mrb[0].mxu0
      %v2622 = vadd.f32 %v2525, %v2621
      %v2623 = vpop.f32.mrb[0].mxu0
      %v2624 = vpop.f32.mrb[0].mxu0
      %v2625 = vadd.f32 %v2528, %v2624
      %v2626 = vpop.f32.mrb[0].mxu0
      %2627 = vmatprep.mubr.bf16.mxu0 %v2194
      %2628 = vmatmul.mubr.bf16.gmra.mrb[0].mxu0 %v2193
      %v2629 = vpop.f32.mrb[0].mxu0
      %v2630 = vadd.f32 %v2533, %v2629
      %v2631 = vpop.f32.mrb[0].mxu0
      %v2632 = vpop.f32.mrb[0].mxu0
      %v2633 = vadd.f32 %v2536, %v2632
      %v2634 = vpop.f32.mrb[0].mxu0
      %2635 = vmatprep.mubr.bf16.mxu0 %v2198
      %2636 = vmatmul.mubr.bf16.gmra.mrb[0].mxu0 %v2197
      %v2637 = vpop.f32.mrb[0].mxu0
      %v2638 = vadd.f32 %v2541, %v2637
      %v2639 = vpop.f32.mrb[0].mxu0
      %v2640 = vpop.f32.mrb[0].mxu0
      %v2641 = vadd.f32 %v2544, %v2640
      %v2642 = vpop.f32.mrb[0].mxu0
      %2643 = vmatprep.mubr.bf16.mxu0 %v2202
      %2644 = vmatmul.mubr.bf16.gmra.mrb[0].mxu0 %v2201
      %v2645 = vpop.f32.mrb[0].mxu0
      %v2646 = vadd.f32 %v2549, %v2645
      %v2647 = vpop.f32.mrb[0].mxu0
      %v2648 = vpop.f32.mrb[0].mxu0
      %v2649 = vadd.f32 %v2552, %v2648
      %v2650 = vpop.f32.mrb[0].mxu0
      %2651 = vmatprep.mubr.bf16.mxu0 %v2206
      %2652 = vmatmul.mubr.bf16.gmra.mrb[0].mxu0 %v2205
      %v2653 = vpop.f32.mrb[0].mxu0
      %v2654 = vadd.f32 %v2557, %v2653
      %v2655 = vpop.f32.mrb[0].mxu0
      %v2656 = vpop.f32.mrb[0].mxu0
      %v2657 = vadd.f32 %v2560, %v2656
      %v2658 = vpop.f32.mrb[0].mxu0
      %2659 = vmatprep.mubr.bf16.mxu0 %v2210
      %2660 = vmatmul.mubr.bf16.gmra.mrb[0].mxu0 %v2209
      %v2661 = vpop.f32.mrb[0].mxu0
      %v2662 = vadd.f32 %v2565, %v2661
      %v2663 = vpop.f32.mrb[0].mxu0
      %v2664 = vpop.f32.mrb[0].mxu0
      %v2665 = vadd.f32 %v2568, %v2664
      %v2666 = vpop.f32.mrb[0].mxu0
      %2667 = vdwg.mxu0
      %v2668 = vmax.f32 %v2606, %v2609
      %v2669 = vrot.slane %v2668, 4
      %v2670 = vmax.f32 %v2668, %v2669
      %v2671 = vrot.slane %v2670, 2
      %v2672 = vmax.f32 %v2670, %v2671
      %v2673 = vrot.slane %v2672, 1
      %v2674 = vmax.f32 %v2672, %v2673
      %v2675 = vmax.f32 %v2614, %v2617
      %v2676 = vrot.slane %v2675, 4
      %v2677 = vmax.f32 %v2675, %v2676
      %v2678 = vrot.slane %v2677, 2
      %v2679 = vmax.f32 %v2677, %v2678
      %v2680 = vrot.slane %v2679, 1
      %v2681 = vmax.f32 %v2679, %v2680
      %v2682 = vmax.f32 %v2622, %v2625
      %v2683 = vrot.slane %v2682, 4
      %v2684 = vmax.f32 %v2682, %v2683
      %v2685 = vrot.slane %v2684, 2
      %v2686 = vmax.f32 %v2684, %v2685
      %v2687 = vrot.slane %v2686, 1
      %v2688 = vmax.f32 %v2686, %v2687
      %v2689 = vmax.f32 %v2630, %v2633
      %v2690 = vrot.slane %v2689, 4
      %v2691 = vmax.f32 %v2689, %v2690
      %v2692 = vrot.slane %v2691, 2
      %v2693 = vmax.f32 %v2691, %v2692
      %v2694 = vrot.slane %v2693, 1
      %v2695 = vmax.f32 %v2693, %v2694
      %v2696 = vmax.f32 %v2638, %v2641
      %v2697 = vrot.slane %v2696, 4
      %v2698 = vmax.f32 %v2696, %v2697
      %v2699 = vrot.slane %v2698, 2
      %v2700 = vmax.f32 %v2698, %v2699
      %v2701 = vrot.slane %v2700, 1
      %v2702 = vmax.f32 %v2700, %v2701
      %v2703 = vmax.f32 %v2646, %v2649
      %v2704 = vrot.slane %v2703, 4
      %v2705 = vmax.f32 %v2703, %v2704
      %v2706 = vrot.slane %v2705, 2
      %v2707 = vmax.f32 %v2705, %v2706
      %v2708 = vrot.slane %v2707, 1
      %v2709 = vmax.f32 %v2707, %v2708
      %v2710 = vmax.f32 %v2654, %v2657
      %v2711 = vrot.slane %v2710, 4
      %v2712 = vmax.f32 %v2710, %v2711
      %v2713 = vrot.slane %v2712, 2
      %v2714 = vmax.f32 %v2712, %v2713
      %v2715 = vrot.slane %v2714, 1
      %v2716 = vmax.f32 %v2714, %v2715
      %v2717 = vmax.f32 %v2662, %v2665
      %v2718 = vrot.slane %v2717, 4
      %v2719 = vmax.f32 %v2717, %v2718
      %v2720 = vrot.slane %v2719, 2
      %v2721 = vmax.f32 %v2719, %v2720
      %v2722 = vrot.slane %v2721, 1
      %v2723 = vmax.f32 %v2721, %v2722
      %v2732 = vsel %vm1392, %v2681, %v2674
      %v2733 = vsel %vm1394, %v2688, %v2732
      %v2734 = vsel %vm1396, %v2695, %v2733
      %v2735 = vsel %vm1398, %v2702, %v2734
      %v2736 = vsel %vm1400, %v2709, %v2735
      %v2737 = vsel %vm1402, %v2716, %v2736
      %v2738 = vsel %vm1404, %v2723, %v2737
      %2740 = vst [vmem:[%s332] sm:$0xff] %v2738
      %p2741 = scmp.lt.s32.totalorder %s20, 1
      %s2742 = scalar_select %p2741, %s20, 1
      %s2743 = smul.addr %s2742, 8
      %s2744 = scalar_lea.vmem %s9, %s2743
      // Predicated region
      $region57: #{pointcloud_tokenizer.1} parent=55 // pred_check
        %p2745 = pneg %p232
      $region58: #{pointcloud_tokenizer.1} parent=55 // pred_check_branch
        %2747 = sbr.rel (%p2745) target = $region60
      $region59: #{pointcloud_tokenizer.1} parent=55 // pred_region
        _
      $region60: #{pointcloud_tokenizer.1} parent=55 // pred_fallthru
        _
    $region56: #{pointcloud_tokenizer.1} parent=5 // pred_fallthru
      _
    %p2748 = scmp.le.s32.totalorder 2, %s15
    // Predicated region
    $region61: #{pointcloud_tokenizer.1} parent=5 // pred_check
      %p2749 = pneg %p2748
    $region62: #{pointcloud_tokenizer.1} parent=5 // pred_check_branch
      %2751 = sbr.rel (%p2749) target = $region64
    $region63: #{pointcloud_tokenizer.1} parent=5 // pred_region
      %s2752 = ssub.s32 %s15, 2
      // Predicated region
      $region65: #{pointcloud_tokenizer.1} parent=63 // pred_check
        %p2753 = pneg %p238
      $region66: #{pointcloud_tokenizer.1} parent=63 // pred_check_branch
        %2755 = sbr.rel (%p2753) target = $region68
      $region67: #{pointcloud_tokenizer.1} parent=63 // pred_region
        %p2756 = scmp.lt.s32.totalorder %s21, 1
        %s2757 = scalar_select %p2756, %s21, 1
        %s2758 = smul.addr %s2757, 8
        %s2759 = scalar_lea.vmem %s9, %s2758
      $region68: #{pointcloud_tokenizer.1} parent=63 // pred_fallthru
        _
    $region64: #{pointcloud_tokenizer.1} parent=5 // pred_fallthru
      _
  $region6: #{pointcloud_tokenizer.1} parent=0 // loop_footer
    %s19 = sadd.s32 1, %s15
  $region7: #{pointcloud_tokenizer.1} parent=0 // loop_footer_branch
    %14 = sbr.rel target = $region3
  $region8: #{pointcloud_tokenizer.1} parent=0 // loop_exit
    _

</llo_original>
